<compile_context>
chip_gen: v7x
topology: tpu7x:2x2x1
jax: 0.10.0
libtpu: 0.0.40
codegen_flags: <defaults>
</compile_context>

<pallas_src>
import functools

import jax
import jax.numpy as jnp
from jax.experimental import pallas as pl
from jax.experimental.pallas import tpu as pltpu


# ------------------------------ fused kernel ------------------------------- #

def _fused_attn_conv_kernel(x_ref, y_ref, g_ref, b_ref, wg_ref, bg_ref,
                            wc_ref, bc_ref, o_ref, *, H, W, mxu_dtype):
    """Per batch: key = LN(y)*scale; gated = tanh(y Wt + bt) * sigmoid(y Ws + bs);
       end = softmax(q key^T) @ gated; out = conv3x3(end) + bias + x (NCHW)."""
    f32 = jnp.float32
    C = x_ref.shape[1]
    N = x_ref.shape[2]

    xc = x_ref[0]                                   # (C, N) channel-major x
    yv = y_ref[0]                                   # (S, C)

    # LayerNorm(y) with the softmax scale pre-folded into gamma/beta.
    mu = jnp.mean(yv, axis=-1, keepdims=True)
    var = jnp.mean((yv - mu) ** 2, axis=-1, keepdims=True)
    key = (yv - mu) * jax.lax.rsqrt(var + 1e-5) * g_ref[...] + b_ref[...]    # (S, C)

    # Gated value branch: one (S, C) @ (C, 2C) matmul, then split the halves.
    g2 = jnp.dot(yv.astype(mxu_dtype), wg_ref[...],
                 preferred_element_type=f32) + bg_ref[...]                    # (S, 2C)
    conc = jnp.tanh(g2[:, :C]) * jax.nn.sigmoid(g2[:, C:])                    # (S, C)

    # Attention scores kept in (S, N): softmax over S is a sublane reduction
    # (all 64 query lanes live), no transpose needed.
    att = jnp.dot(key.astype(mxu_dtype), xc.astype(mxu_dtype),
                  preferred_element_type=f32)                                 # (S, N)
    att = att - jnp.max(att, axis=0, keepdims=True)
    p = jnp.exp(att)
    p = p * pl.reciprocal(jnp.sum(p, axis=0, keepdims=True), approx=True)     # (S, N)

    # Attention output directly channel-major: contract S (dim 0 of both).
    end_cn = jax.lax.dot_general(
        conc.astype(mxu_dtype), p.astype(mxu_dtype),
        dimension_numbers=(((0,), (0,)), ((), ())),
        preferred_element_type=f32)                                           # (C, N)

    # 3x3 conv (padding=1, stride=1) as a single K=9C im2col matmul.
    # Zero halo along the flattened-spatial LANE axis (pad >= W+1), so every
    # out-of-range-row read lands in zeros; only the dx = +-1 column masks are
    # needed.  Tap stacking offsets are multiples of C -> sublane-aligned.
    pad = W + 1
    end_m = end_cn.astype(mxu_dtype)                       # single cast, before the loop
    zpad = jnp.zeros((C, pad), mxu_dtype)
    padded = jnp.concatenate([zpad, end_m, zpad], axis=1)  # (C, N + 2*pad)

    lane_w = jax.lax.broadcasted_iota(jnp.int32, (1, N), 1) % W
    mask_dx = {-1: lane_w >= 1, 0: None, 1: lane_w <= W - 2}   # hoisted, reused 3x each

    taps = []
    for k in range(9):
        dy, dx = k // 3 - 1, k % 3 - 1
        start = pad + dy * W + dx
        tap = padded[:, start:start + N]                    # (C, N) lane slice
        m = mask_dx[dx]
        if m is not None:
            tap = jnp.where(m, tap, jnp.zeros_like(tap))
        taps.append(tap)
    patches = jnp.concatenate(taps, axis=0)                 # (9C, N), sublane-aligned

    conv = jnp.dot(wc_ref[...], patches, preferred_element_type=f32)          # (C, N)
    o_ref[0] = (conv + bc_ref[...] + xc).astype(o_ref.dtype)                  # + bias + residual


# --------------------------------- wrapper --------------------------------- #

def multi_attn_fusion(x_nchw, y, params, emb_dim, mxu_dtype=jnp.float32):
    B, C, H, W = x_nchw.shape
    assert C == emb_dim, "channel count must equal emb_dim in this module"
    N = H * W
    S = y.shape[1]
    scale = float(emb_dim) ** (-0.5)

    # Free (byte-identical) view: NCHW -> (B, C, N).  No wrapper transposes.
    x_cn = x_nchw.reshape(B, C, N)

    # Weight prep (one-time): fold softmax scale into the LN affine, concat the
    # two gate projections, lay the conv weight out for the (C, 9C) im2col dot.
    ln_g = (params["ln_g"] * scale).astype(jnp.float32).reshape(1, C)
    ln_b = (params["ln_b"] * scale).astype(jnp.float32).reshape(1, C)
    wg = jnp.concatenate([params["wt"], params["ws"]], axis=1).astype(mxu_dtype)    # (C, 2C)
    bg = jnp.concatenate([params["bt"], params["bs"]], axis=1).astype(jnp.float32)  # (1, 2C)
    wc = jnp.transpose(params["conv_w"], (0, 2, 3, 1)).reshape(C, 9 * C).astype(mxu_dtype)
    bc = params["conv_b"].reshape(C, 1).astype(jnp.float32)

    kernel = functools.partial(_fused_attn_conv_kernel, H=H, W=W, mxu_dtype=mxu_dtype)

    flops = 2 * B * (S * C * N + S * C * 2 * C + C * S * N + C * 9 * C * N)
    transcendentals = B * (S * N + 2 * S * C)
    bytes_accessed = int(
        4 * (x_cn.size + y.size + B * C * N)
        + wg.size * jnp.dtype(mxu_dtype).itemsize
        + wc.size * jnp.dtype(mxu_dtype).itemsize
        + 4 * (ln_g.size + ln_b.size + bg.size + bc.size))

    out = pl.pallas_call(
        kernel,
        out_shape=jax.ShapeDtypeStruct((B, C, N), jnp.float32),
        grid=(B,),
        in_specs=[
            pl.BlockSpec((1, C, N), lambda b: (b, 0, 0)),     # x (channel-major)
            pl.BlockSpec((1, S, C), lambda b: (b, 0, 0)),     # y
            pl.BlockSpec((1, C), lambda b: (0, 0)),           # LN gamma * scale
            pl.BlockSpec((1, C), lambda b: (0, 0)),           # LN beta  * scale
            pl.BlockSpec((C, 2 * C), lambda b: (0, 0)),       # [wt | ws]
            pl.BlockSpec((1, 2 * C), lambda b: (0, 0)),       # [bt | bs]
            pl.BlockSpec((C, 9 * C), lambda b: (0, 0)),       # conv weight (co, k*C+ci)
            pl.BlockSpec((C, 1), lambda b: (0, 0)),           # conv bias
        ],
        out_specs=pl.BlockSpec((1, C, N), lambda b: (b, 0, 0)),
        compiler_params=pltpu.CompilerParams(dimension_semantics=("parallel",)),
        cost_estimate=pl.CostEstimate(flops=flops,
                                      transcendentals=transcendentals,
                                      bytes_accessed=bytes_accessed),
    )(x_cn, y, ln_g, ln_b, wg, bg, wc, bc)

    return out.reshape(B, C, H, W)                  # free view back to NCHW


# --------------------- deterministic synthetic params --------------------- #

def init_params(key, emb_dim):
    ks = jax.random.split(key, 8)
    lim = 1.0 / (emb_dim ** 0.5)
    return dict(
        ln_g=(1.0 + 0.1 * jax.random.normal(ks[0], (1, emb_dim))).astype(jnp.float32),
        ln_b=(0.1 * jax.random.normal(ks[1], (1, emb_dim))).astype(jnp.float32),
        wt=jax.random.uniform(ks[2], (emb_dim, emb_dim), minval=-lim, maxval=lim),
        bt=jax.random.uniform(ks[3], (1, emb_dim), minval=-lim, maxval=lim),
        ws=jax.random.uniform(ks[4], (emb_dim, emb_dim), minval=-lim, maxval=lim),
        bs=jax.random.uniform(ks[5], (1, emb_dim), minval=-lim, maxval=lim),
        conv_w=0.05 * jax.random.normal(ks[6], (emb_dim, emb_dim, 3, 3)),
        conv_b=0.05 * jax.random.normal(ks[7], (emb_dim,)),
    )


# ----------------------------- pure-JAX ref -------------------------------- #

def ref_forward(x, y, p, emb_dim):
    B, C, H, W = x.shape
    scale = float(emb_dim) ** (-0.5)
    q = jnp.transpose(x.reshape(B, C, H * W), (0, 2, 1))
    mean = jnp.mean(y, axis=-1, keepdims=True)
    var = jnp.mean((y - mean) ** 2, axis=-1, keepdims=True)
    key = (y - mean) / jnp.sqrt(var + 1e-5) * p["ln_g"][0] + p["ln_b"][0]
    conc = jnp.tanh(y @ p["wt"] + p["bt"][0]) * jax.nn.sigmoid(y @ p["ws"] + p["bs"][0])
    attn = jax.nn.softmax(q @ jnp.swapaxes(key, -1, -2) * scale, axis=-1)
    end = jnp.transpose(attn @ conc, (0, 2, 1)).reshape(B, C, H, W)
    conv = jax.lax.conv_general_dilated(
        end, p["conv_w"], (1, 1), "SAME",
        dimension_numbers=("NCHW", "OIHW", "NCHW")) + p["conv_b"][None, :, None, None]
    return conv + x


# --------------------------------- main ------------------------------------ #

if __name__ == "__main__":
    emb_dim = 64           # channels must equal emb_dim in this module
    B, H, W, S = 2, 8, 8, 8

    key = jax.random.PRNGKey(0)
    kx, ky, kp = jax.random.split(key, 3)
    x = jax.random.normal(kx, (B, emb_dim, H, W), jnp.float32)   # NCHW like PyTorch
    y = jax.random.normal(ky, (B, S, emb_dim), jnp.float32)
    params = init_params(kp, emb_dim)

    out = multi_attn_fusion(x, y, params, emb_dim)
    out = jax.block_until_ready(out)

    ref = ref_forward(x, y, params, emb_dim)
    assert out.shape == (B, emb_dim, H, W)
    max_err = float(jnp.max(jnp.abs(out - ref)))
    # f32 MXU operands keep parity ~1e-4; the approx softmax reciprocal (real
    # TPU only) stays well under this bound.
    assert max_err < 1e-2, f"max abs err {max_err}"
    print("KERNEL_OK")
</pallas_src>

<mosaic_0001>
module attributes {stable_mosaic.version = 11 : i64} {
  func.func @_fused_attn_conv_kernel(%arg0: i32, %arg1: memref<1x64x64xf32, #tpu.memory_space<vmem>>, %arg2: memref<1x8x64xf32, #tpu.memory_space<vmem>>, %arg3: memref<1x64xf32, #tpu.memory_space<vmem>>, %arg4: memref<1x64xf32, #tpu.memory_space<vmem>>, %arg5: memref<64x128xf32, #tpu.memory_space<vmem>>, %arg6: memref<1x128xf32, #tpu.memory_space<vmem>>, %arg7: memref<64x576xf32, #tpu.memory_space<vmem>>, %arg8: memref<64x1xf32, #tpu.memory_space<vmem>>, %arg9: memref<1x64x64xf32, #tpu.memory_space<vmem>>) attributes {dimension_semantics = [#tpu.dimension_semantics<parallel>], iteration_bounds = array<i64: 2>, scalar_prefetch = 0 : i64, scratch_operands = 0 : i64, tpu.core_type = #tpu.core_type<tc>, window_params = [{transform_indices = @transform_0, window_bounds = array<i64: 1, 64, 64>}, {transform_indices = @transform_1, window_bounds = array<i64: 1, 8, 64>}, {pipeline_mode = #tpu.pipeline_mode<synchronous>, transform_indices = @transform_2, window_bounds = array<i64: 1, 64>}, {pipeline_mode = #tpu.pipeline_mode<synchronous>, transform_indices = @transform_3, window_bounds = array<i64: 1, 64>}, {pipeline_mode = #tpu.pipeline_mode<synchronous>, transform_indices = @transform_4, window_bounds = array<i64: 64, 128>}, {pipeline_mode = #tpu.pipeline_mode<synchronous>, transform_indices = @transform_5, window_bounds = array<i64: 1, 128>}, {pipeline_mode = #tpu.pipeline_mode<synchronous>, transform_indices = @transform_6, window_bounds = array<i64: 64, 576>}, {pipeline_mode = #tpu.pipeline_mode<synchronous>, transform_indices = @transform_7, window_bounds = array<i64: 64, 1>}, {transform_indices = @transform_8, window_bounds = array<i64: 1, 64, 64>}]} {
    %c0 = arith.constant 0 : index
    %c0_0 = arith.constant 0 : index
    %c0_1 = arith.constant 0 : index
    %0 = vector.load %arg1[%c0, %c0_0, %c0_1] : memref<1x64x64xf32, #tpu.memory_space<vmem>>, vector<1x64x64xf32>
    %1 = vector.shape_cast %0 : vector<1x64x64xf32> to vector<64x64xf32>
    %c0_2 = arith.constant 0 : index
    %c0_3 = arith.constant 0 : index
    %c0_4 = arith.constant 0 : index
    %2 = vector.load %arg2[%c0_2, %c0_3, %c0_4] : memref<1x8x64xf32, #tpu.memory_space<vmem>>, vector<1x8x64xf32>
    %3 = vector.shape_cast %2 : vector<1x8x64xf32> to vector<8x64xf32>
    %cst = arith.constant dense<0.000000e+00> : vector<8xf32>
    %4 = vector.multi_reduction <add>, %3, %cst [1] : vector<8x64xf32> to vector<8xf32>
    %5 = vector.shape_cast %4 : vector<8xf32> to vector<8x1xf32>
    %cst_5 = arith.constant 6.400000e+01 : f32
    %6 = vector.broadcast %cst_5 : f32 to vector<8x1xf32>
    %7 = arith.divf %5, %6 : vector<8x1xf32>
    %8 = vector.broadcast %7 : vector<8x1xf32> to vector<8x64xf32>
    %9 = arith.subf %3, %8 : vector<8x64xf32>
    %10 = arith.mulf %9, %9 : vector<8x64xf32>
    %cst_6 = arith.constant dense<0.000000e+00> : vector<8xf32>
    %11 = vector.multi_reduction <add>, %10, %cst_6 [1] : vector<8x64xf32> to vector<8xf32>
    %12 = vector.shape_cast %11 : vector<8xf32> to vector<8x1xf32>
    %cst_7 = arith.constant 6.400000e+01 : f32
    %13 = vector.broadcast %cst_7 : f32 to vector<8x1xf32>
    %14 = arith.divf %12, %13 : vector<8x1xf32>
    %15 = vector.broadcast %7 : vector<8x1xf32> to vector<8x64xf32>
    %16 = arith.subf %3, %15 : vector<8x64xf32>
    %cst_8 = arith.constant 9.99999974E-6 : f32
    %17 = vector.broadcast %cst_8 : f32 to vector<8x1xf32>
    %18 = arith.addf %14, %17 : vector<8x1xf32>
    %19 = math.rsqrt %18 : vector<8x1xf32>
    %20 = vector.broadcast %19 : vector<8x1xf32> to vector<8x64xf32>
    %21 = arith.mulf %16, %20 : vector<8x64xf32>
    %c0_9 = arith.constant 0 : index
    %c0_10 = arith.constant 0 : index
    %22 = vector.load %arg3[%c0_9, %c0_10] : memref<1x64xf32, #tpu.memory_space<vmem>>, vector<1x64xf32>
    %23 = vector.broadcast %22 : vector<1x64xf32> to vector<8x64xf32>
    %24 = arith.mulf %21, %23 : vector<8x64xf32>
    %c0_11 = arith.constant 0 : index
    %c0_12 = arith.constant 0 : index
    %25 = vector.load %arg4[%c0_11, %c0_12] : memref<1x64xf32, #tpu.memory_space<vmem>>, vector<1x64xf32>
    %26 = vector.broadcast %25 : vector<1x64xf32> to vector<8x64xf32>
    %27 = arith.addf %24, %26 : vector<8x64xf32>
    %c0_13 = arith.constant 0 : index
    %c0_14 = arith.constant 0 : index
    %28 = vector.load %arg5[%c0_13, %c0_14] : memref<64x128xf32, #tpu.memory_space<vmem>>, vector<64x128xf32>
    %cst_15 = arith.constant dense<0.000000e+00> : vector<8x128xf32>
    %29 = tpu.matmul %3, %28, %cst_15 {dimension_numbers = #tpu.dot_dimension_numbers<[1], [0], [0], [1], [0, 0, 1, 1], [], []>} : vector<8x64xf32>, vector<64x128xf32>, vector<8x128xf32> -> vector<8x128xf32>
    %c0_16 = arith.constant 0 : index
    %c0_17 = arith.constant 0 : index
    %30 = vector.load %arg6[%c0_16, %c0_17] : memref<1x128xf32, #tpu.memory_space<vmem>>, vector<1x128xf32>
    %31 = vector.broadcast %30 : vector<1x128xf32> to vector<8x128xf32>
    %32 = arith.addf %29, %31 : vector<8x128xf32>
    %33 = vector.extract_strided_slice %32 {offsets = [0, 0], sizes = [8, 64], strides = [1, 1]} : vector<8x128xf32> to vector<8x64xf32>
    %34 = math.tanh %33 : vector<8x64xf32>
    %35 = vector.extract_strided_slice %32 {offsets = [0, 64], sizes = [8, 64], strides = [1, 1]} : vector<8x128xf32> to vector<8x64xf32>
    %36 = arith.negf %35 : vector<8x64xf32>
    %37 = math.exp %36 : vector<8x64xf32>
    %cst_18 = arith.constant 1.000000e+00 : f32
    %38 = vector.broadcast %cst_18 : f32 to vector<8x64xf32>
    %39 = arith.addf %38, %37 : vector<8x64xf32>
    %40 = arith.divf %38, %39 : vector<8x64xf32>
    %41 = arith.mulf %34, %40 : vector<8x64xf32>
    %cst_19 = arith.constant dense<0.000000e+00> : vector<8x64xf32>
    %42 = tpu.matmul %27, %1, %cst_19 {dimension_numbers = #tpu.dot_dimension_numbers<[1], [0], [0], [1], [0, 0, 1, 1], [], []>} : vector<8x64xf32>, vector<64x64xf32>, vector<8x64xf32> -> vector<8x64xf32>
    %cst_20 = arith.constant dense<0xFF800000> : vector<64xf32>
    %43 = vector.multi_reduction <maximumf>, %42, %cst_20 [0] : vector<8x64xf32> to vector<64xf32>
    %44 = vector.shape_cast %43 : vector<64xf32> to vector<1x64xf32>
    %45 = vector.broadcast %44 : vector<1x64xf32> to vector<8x64xf32>
    %46 = arith.subf %42, %45 : vector<8x64xf32>
    %47 = math.exp %46 : vector<8x64xf32>
    %cst_21 = arith.constant dense<0.000000e+00> : vector<64xf32>
    %48 = vector.multi_reduction <add>, %47, %cst_21 [0] : vector<8x64xf32> to vector<64xf32>
    %49 = vector.shape_cast %48 : vector<64xf32> to vector<1x64xf32>
    %50 = tpu.reciprocal %49 {approx = true} : vector<1x64xf32> -> vector<1x64xf32>
    %51 = vector.broadcast %50 : vector<1x64xf32> to vector<8x64xf32>
    %52 = arith.mulf %47, %51 : vector<8x64xf32>
    %cst_22 = arith.constant dense<0.000000e+00> : vector<64x64xf32>
    %53 = tpu.matmul %41, %52, %cst_22 {dimension_numbers = #tpu.dot_dimension_numbers<[0], [0], [1], [1], [0, 1, 1, 1], [], []>} : vector<8x64xf32>, vector<8x64xf32>, vector<64x64xf32> -> vector<64x64xf32>
    %cst_23 = arith.constant 0.000000e+00 : f32
    %54 = vector.broadcast %cst_23 : f32 to vector<64x9xf32>
    %55 = tpu.concatenate %54, %53, %54 in 1 : vector<64x9xf32>, vector<64x64xf32>, vector<64x9xf32> -> vector<64x82xf32>
    %56 = tpu.iota {dimensions = array<i32: 1>} : vector<1x64xi32>
    %c8_i32 = arith.constant 8 : i32
    %c0_i32 = arith.constant 0 : i32
    %57 = arith.cmpi eq, %c8_i32, %c0_i32 : i32
    %c1_i32 = arith.constant 1 : i32
    %58 = arith.select %57, %c1_i32, %c8_i32 : i32
    %59 = vector.broadcast %58 : i32 to vector<1x64xi32>
    %60 = arith.remsi %56, %59 : vector<1x64xi32>
    %c0_i32_24 = arith.constant 0 : i32
    %61 = vector.broadcast %c0_i32_24 : i32 to vector<1x64xi32>
    %62 = arith.cmpi ne, %60, %61 : vector<1x64xi32>
    %c0_i32_25 = arith.constant 0 : i32
    %63 = vector.broadcast %c0_i32_25 : i32 to vector<1x64xi32>
    %64 = arith.cmpi slt, %60, %63 : vector<1x64xi32>
    %c0_i32_26 = arith.constant 0 : i32
    %65 = arith.cmpi slt, %58, %c0_i32_26 : i32
    %66 = vector.broadcast %65 : i1 to vector<1x64xi1>
    %67 = vector.broadcast %66 : vector<1x64xi1> to vector<1x64xi1>
    %68 = arith.xori %64, %67 : vector<1x64xi1>
    %69 = arith.andi %68, %62 : vector<1x64xi1>
    %70 = vector.broadcast %58 : i32 to vector<1x64xi32>
    %71 = arith.addi %60, %70 : vector<1x64xi32>
    %72 = arith.select %69, %71, %60 : vector<1x64xi1>, vector<1x64xi32>
    %c1_i32_27 = arith.constant 1 : i32
    %73 = vector.broadcast %c1_i32_27 : i32 to vector<1x64xi32>
    %74 = arith.cmpi sge, %72, %73 : vector<1x64xi32>
    %c6_i32 = arith.constant 6 : i32
    %75 = vector.broadcast %c6_i32 : i32 to vector<1x64xi32>
    %76 = arith.cmpi sle, %72, %75 : vector<1x64xi32>
    %77 = vector.extract_strided_slice %55 {offsets = [0, 0], sizes = [64, 64], strides = [1, 1]} : vector<64x82xf32> to vector<64x64xf32>
    %cst_28 = arith.constant 0.000000e+00 : f32
    %78 = vector.broadcast %cst_28 : f32 to vector<64x64xf32>
    %79 = vector.shape_cast %74 : vector<1x64xi1> to vector<1x64xi1>
    %80 = vector.broadcast %79 : vector<1x64xi1> to vector<64x64xi1>
    %81 = arith.select %80, %77, %78 : vector<64x64xi1>, vector<64x64xf32>
    %82 = vector.extract_strided_slice %55 {offsets = [0, 1], sizes = [64, 64], strides = [1, 1]} : vector<64x82xf32> to vector<64x64xf32>
    %83 = vector.extract_strided_slice %55 {offsets = [0, 2], sizes = [64, 64], strides = [1, 1]} : vector<64x82xf32> to vector<64x64xf32>
    %cst_29 = arith.constant 0.000000e+00 : f32
    %84 = vector.broadcast %cst_29 : f32 to vector<64x64xf32>
    %85 = vector.shape_cast %76 : vector<1x64xi1> to vector<1x64xi1>
    %86 = vector.broadcast %85 : vector<1x64xi1> to vector<64x64xi1>
    %87 = arith.select %86, %83, %84 : vector<64x64xi1>, vector<64x64xf32>
    %88 = vector.extract_strided_slice %55 {offsets = [0, 8], sizes = [64, 64], strides = [1, 1]} : vector<64x82xf32> to vector<64x64xf32>
    %cst_30 = arith.constant 0.000000e+00 : f32
    %89 = vector.broadcast %cst_30 : f32 to vector<64x64xf32>
    %90 = vector.shape_cast %74 : vector<1x64xi1> to vector<1x64xi1>
    %91 = vector.broadcast %90 : vector<1x64xi1> to vector<64x64xi1>
    %92 = arith.select %91, %88, %89 : vector<64x64xi1>, vector<64x64xf32>
    %93 = vector.extract_strided_slice %55 {offsets = [0, 9], sizes = [64, 64], strides = [1, 1]} : vector<64x82xf32> to vector<64x64xf32>
    %94 = vector.extract_strided_slice %55 {offsets = [0, 10], sizes = [64, 64], strides = [1, 1]} : vector<64x82xf32> to vector<64x64xf32>
    %cst_31 = arith.constant 0.000000e+00 : f32
    %95 = vector.broadcast %cst_31 : f32 to vector<64x64xf32>
    %96 = vector.shape_cast %76 : vector<1x64xi1> to vector<1x64xi1>
    %97 = vector.broadcast %96 : vector<1x64xi1> to vector<64x64xi1>
    %98 = arith.select %97, %94, %95 : vector<64x64xi1>, vector<64x64xf32>
    %99 = vector.extract_strided_slice %55 {offsets = [0, 16], sizes = [64, 64], strides = [1, 1]} : vector<64x82xf32> to vector<64x64xf32>
    %cst_32 = arith.constant 0.000000e+00 : f32
    %100 = vector.broadcast %cst_32 : f32 to vector<64x64xf32>
    %101 = vector.shape_cast %74 : vector<1x64xi1> to vector<1x64xi1>
    %102 = vector.broadcast %101 : vector<1x64xi1> to vector<64x64xi1>
    %103 = arith.select %102, %99, %100 : vector<64x64xi1>, vector<64x64xf32>
    %104 = vector.extract_strided_slice %55 {offsets = [0, 17], sizes = [64, 64], strides = [1, 1]} : vector<64x82xf32> to vector<64x64xf32>
    %105 = vector.extract_strided_slice %55 {offsets = [0, 18], sizes = [64, 64], strides = [1, 1]} : vector<64x82xf32> to vector<64x64xf32>
    %cst_33 = arith.constant 0.000000e+00 : f32
    %106 = vector.broadcast %cst_33 : f32 to vector<64x64xf32>
    %107 = vector.shape_cast %76 : vector<1x64xi1> to vector<1x64xi1>
    %108 = vector.broadcast %107 : vector<1x64xi1> to vector<64x64xi1>
    %109 = arith.select %108, %105, %106 : vector<64x64xi1>, vector<64x64xf32>
    %110 = tpu.concatenate %81, %82, %87, %92, %93, %98, %103, %104, %109 in 0 : vector<64x64xf32>, vector<64x64xf32>, vector<64x64xf32>, vector<64x64xf32>, vector<64x64xf32>, vector<64x64xf32>, vector<64x64xf32>, vector<64x64xf32>, vector<64x64xf32> -> vector<576x64xf32>
    %c0_34 = arith.constant 0 : index
    %c0_35 = arith.constant 0 : index
    %111 = vector.load %arg7[%c0_34, %c0_35] : memref<64x576xf32, #tpu.memory_space<vmem>>, vector<64x576xf32>
    %cst_36 = arith.constant dense<0.000000e+00> : vector<64x64xf32>
    %112 = tpu.matmul %111, %110, %cst_36 {dimension_numbers = #tpu.dot_dimension_numbers<[1], [0], [0], [1], [0, 0, 1, 1], [], []>} : vector<64x576xf32>, vector<576x64xf32>, vector<64x64xf32> -> vector<64x64xf32>
    %c0_37 = arith.constant 0 : index
    %c0_38 = arith.constant 0 : index
    %113 = vector.load %arg8[%c0_37, %c0_38] : memref<64x1xf32, #tpu.memory_space<vmem>>, vector<64x1xf32>
    %114 = vector.broadcast %113 : vector<64x1xf32> to vector<64x64xf32>
    %115 = arith.addf %112, %114 : vector<64x64xf32>
    %116 = arith.addf %115, %1 : vector<64x64xf32>
    %c0_39 = arith.constant 0 : index
    %c0_40 = arith.constant 0 : index
    %c0_41 = arith.constant 0 : index
    %117 = vector.load %arg9[%c0_39, %c0_40, %c0_41] : memref<1x64x64xf32, #tpu.memory_space<vmem>>, vector<1x64x64xf32>
    %118 = vector.shape_cast %117 : vector<1x64x64xf32> to vector<64x64xf32>
    %119 = vector.shape_cast %116 : vector<64x64xf32> to vector<1x64x64xf32>
    tpu.vector_store %arg9[%c0_39, %c0_40, %c0_41], %119 {strides = array<i32>} : memref<1x64x64xf32, #tpu.memory_space<vmem>>, vector<1x64x64xf32>,
    return
  }
  func.func @transform_0(%arg0: i32) -> (i32, i32, i32) {
    %c0_i32 = arith.constant 0 : i32
    %c0_i32_0 = arith.constant 0 : i32
    %c0_i32_1 = arith.constant 0 : i32
    return %arg0, %c0_i32, %c0_i32_0 : i32, i32, i32
  }
  func.func @transform_1(%arg0: i32) -> (i32, i32, i32) {
    %c0_i32 = arith.constant 0 : i32
    %c0_i32_0 = arith.constant 0 : i32
    %c0_i32_1 = arith.constant 0 : i32
    return %arg0, %c0_i32, %c0_i32_0 : i32, i32, i32
  }
  func.func @transform_2(%arg0: i32) -> (i32, i32) {
    %c0_i32 = arith.constant 0 : i32
    %c0_i32_0 = arith.constant 0 : i32
    %c0_i32_1 = arith.constant 0 : i32
    return %c0_i32, %c0_i32_0 : i32, i32
  }
  func.func @transform_3(%arg0: i32) -> (i32, i32) {
    %c0_i32 = arith.constant 0 : i32
    %c0_i32_0 = arith.constant 0 : i32
    %c0_i32_1 = arith.constant 0 : i32
    return %c0_i32, %c0_i32_0 : i32, i32
  }
  func.func @transform_4(%arg0: i32) -> (i32, i32) {
    %c0_i32 = arith.constant 0 : i32
    %c0_i32_0 = arith.constant 0 : i32
    %c0_i32_1 = arith.constant 0 : i32
    return %c0_i32, %c0_i32_0 : i32, i32
  }
  func.func @transform_5(%arg0: i32) -> (i32, i32) {
    %c0_i32 = arith.constant 0 : i32
    %c0_i32_0 = arith.constant 0 : i32
    %c0_i32_1 = arith.constant 0 : i32
    return %c0_i32, %c0_i32_0 : i32, i32
  }
  func.func @transform_6(%arg0: i32) -> (i32, i32) {
    %c0_i32 = arith.constant 0 : i32
    %c0_i32_0 = arith.constant 0 : i32
    %c0_i32_1 = arith.constant 0 : i32
    return %c0_i32, %c0_i32_0 : i32, i32
  }
  func.func @transform_7(%arg0: i32) -> (i32, i32) {
    %c0_i32 = arith.constant 0 : i32
    %c0_i32_0 = arith.constant 0 : i32
    %c0_i32_1 = arith.constant 0 : i32
    return %c0_i32, %c0_i32_0 : i32, i32
  }
  func.func @transform_8(%arg0: i32) -> (i32, i32, i32) {
    %c0_i32 = arith.constant 0 : i32
    %c0_i32_0 = arith.constant 0 : i32
    %c0_i32_1 = arith.constant 0 : i32
    return %arg0, %c0_i32, %c0_i32_0 : i32, i32, i32
  }
}

</mosaic_0001>

<llo_original>
// kernel: tpu_custom_call.1
$region0: #{tpu_custom_call.1}
  #allocation0 [shape = 'u32[]', space=smem, size = 0x4, offset = 0x4, fixed_abs, tag = 'smem constant byte address 0x4 - core index']
  #allocation1 [shape = 'u32[144,128]{1,0:T(1,128)}', space=vmem, size = 0x12000, scoped, tag = 'internal scratch']
  %s0 = inlined_call_operand.hbm [shape: f32[2,64,64], index: 0, kind: input, shape index: {}]
  %s1 = inlined_call_operand.vmem [shape: f32[2,8,64], index: 1, kind: input, shape index: {}]
  %s2 = inlined_call_operand.hbm [shape: f32[1,64], index: 2, kind: input, shape index: {}]
  %s3 = inlined_call_operand.hbm [shape: f32[1,64], index: 3, kind: input, shape index: {}]
  %s4 = inlined_call_operand.vmem [shape: f32[64,128], index: 4, kind: input, shape index: {}]
  %s5 = inlined_call_operand.vmem [shape: f32[1,128], index: 5, kind: input, shape index: {}]
  %s6 = inlined_call_operand.hbm [shape: f32[64,576], index: 6, kind: input, shape index: {}]
  %s7 = inlined_call_operand.vmem [shape: f32[64,1], index: 7, kind: input, shape index: {}]
  %s8 = inlined_call_operand.hbm [shape: f32[2,64,64], index: 8, kind: output, shape index: {}]
  %s9 = sld [smem:[#allocation0]]
  $region81: #{tpu_custom_call.1} parent=0
    _
  %s11 = ssub.s32 1, %s9
  %s12 = scalar_select 0, %s11, %s9
  $region1: #{tpu_custom_call.1} parent=0
    #allocation2 [shape = 'u8[65536]{0}', space=vmem, size = 0x10000, scoped, tag = 'input window, operand 0']
    #allocation3 [shape = 's32[2]{0}', space=sflag, size = 0x8, scoped, tag = 'scoped memory for tpu_custom_call.1']
    #allocation4 [shape = 's32[2]{0}', space=sflag, size = 0x8, scoped, tag = 'scoped memory for tpu_custom_call.1']
    #allocation5 [shape = 'u8[512]{0}', space=vmem, size = 0x400, scoped, tag = 'input window, operand 2, single buffered']
    #allocation6 [shape = 's32[1]{0}', space=sflag, size = 0x4, scoped, tag = 'scoped memory for tpu_custom_call.1']
    #allocation7 [shape = 'u8[512]{0}', space=vmem, size = 0x400, scoped, tag = 'input window, operand 3, single buffered']
    #allocation8 [shape = 'u8[163840]{0}', space=vmem, size = 0x28000, scoped, tag = 'input window, operand 6, single buffered']
    #allocation9 [shape = 's32[1]{0}', space=sflag, size = 0x4, scoped, tag = 'scoped memory for tpu_custom_call.1']
    #allocation10 [shape = 'u8[65536]{0}', space=vmem, size = 0x10000, scoped, tag = 'output window, operand 0']
    %13 = vsyncpa [#allocation3], 0
    %s14 = scalar_lea.sflag [#allocation3], 1
    %15 = vsyncpa %s14, 0
    %16 = vsyncpa [#allocation6], 0
    %17 = vsyncpa [#allocation9], 0
    %18 = vsyncpa [#allocation4], 0
    %s19 = scalar_lea.sflag [#allocation4], 1
    %20 = vsyncpa %s19, 0
    loop: start=0, step=1, limit=4
    $region2: #{tpu_custom_call.1} parent=1 // loop_pre_header
      _
    $region3: #{tpu_custom_call.1} parent=1 // loop_header
      %s22 = sphi 0, %s26
      %p23 = scmp.ge.s32.totalorder %s22, 4
      %s32 = sphi 0, %s34
      %s35 = sphi 0, %s32
      %s36 = sphi 0, %s35
      %s52 = sphi 0, %s36
      %s58 = sphi 0, %s60
      %s61 = sphi 0, %s58
      %s62 = sphi 0, %s61
      %s78 = sphi 0, %s62
      %s82 = sphi 0, %s82
      %s84 = sphi 0, %s82
      %s85 = sphi 0, %s84
      %s99 = sphi 0, %s85
      %s103 = sphi 0, %s103
      %s105 = sphi 0, %s103
      %s106 = sphi 0, %s105
      %s120 = sphi 0, %s106
      %s124 = sphi 0, %s124
      %s126 = sphi 0, %s124
      %s127 = sphi 0, %s126
      %s141 = sphi 0, %s127
      %s145 = sphi 0, %s145
      %s147 = sphi 0, %s145
      %s148 = sphi 0, %s147
      %s162 = sphi 0, %s148
      %s166 = sphi 0, %s166
      %s168 = sphi 0, %s166
      %s169 = sphi 0, %s168
      %s183 = sphi 0, %s169
      %s187 = sphi 0, %s187
      %s189 = sphi 0, %s187
      %s190 = sphi 0, %s189
      %s204 = sphi 0, %s190
      %s210 = sphi 0, %s212
      %s213 = sphi 0, %s210
      %s214 = sphi 0, %s213
      %s230 = sphi 0, %s214
    $region4: #{tpu_custom_call.1} parent=1 // loop_header_branch
      %25 = sbr.rel (%p23) target = $region8
    $region5: #{tpu_custom_call.1} parent=1 // loop_body
      %s27 = ssub.s32 %s22, 1
      %s28 = ssub.s32 %s22, 2
      %s29 = sadd.s32 %s22, 1
      %s30 = ssub.s32 %s22, %s29
      %p31 = scmp.eq.s32.totalorder %s30, 0
      %s33 = sadd.s32 %s32, 1
      %s34 = scalar_select %p31, %s32, %s33
      %p37 = pneg %p31
      %p38 = scmp.eq.s32.totalorder %s22, 1
      %p39 = por %p37, %p38
      %p40 = scmp.ne.s32.totalorder %s32, %s35
      %p41 = scmp.eq.s32.totalorder %s22, 0
      %p42 = por %p40, %p41
      %p43 = scmp.ne.s32.totalorder %s32, %s35
      %p44 = scmp.eq.s32.totalorder %s27, 1
      %p45 = por %p43, %p44
      %p46 = scmp.ne.s32.totalorder %s35, %s36
      %p47 = scmp.eq.s32.totalorder %s27, 0
      %p48 = por %p46, %p47
      %p49 = scmp.ne.s32.totalorder %s35, %s36
      %p50 = scmp.eq.s32.totalorder %s28, 1
      %p51 = por %p49, %p50
      %p53 = scmp.ne.s32.totalorder %s36, %s52
      %p54 = scmp.eq.s32.totalorder %s28, 0
      %p55 = por %p53, %p54
      %s56 = ssub.s32 %s22, %s29
      %p57 = scmp.eq.s32.totalorder %s56, 0
      %s59 = sadd.s32 %s58, 1
      %s60 = scalar_select %p57, %s58, %s59
      %p63 = pneg %p57
      %p64 = scmp.eq.s32.totalorder %s22, 1
      %p65 = por %p63, %p64
      %p66 = scmp.ne.s32.totalorder %s58, %s61
      %p67 = scmp.eq.s32.totalorder %s22, 0
      %p68 = por %p66, %p67
      %p69 = scmp.ne.s32.totalorder %s58, %s61
      %p70 = scmp.eq.s32.totalorder %s27, 1
      %p71 = por %p69, %p70
      %p72 = scmp.ne.s32.totalorder %s61, %s62
      %p73 = scmp.eq.s32.totalorder %s27, 0
      %p74 = por %p72, %p73
      %p75 = scmp.ne.s32.totalorder %s61, %s62
      %p76 = scmp.eq.s32.totalorder %s28, 1
      %p77 = por %p75, %p76
      %p79 = scmp.ne.s32.totalorder %s62, %s78
      %p80 = scmp.eq.s32.totalorder %s28, 0
      %p81 = por %p79, %p80
      %s83 = sadd.s32 %s82, 1
      %p86 = scmp.eq.s32.totalorder %s22, 1
      %p87 = scmp.ne.s32.totalorder %s82, %s84
      %p88 = scmp.eq.s32.totalorder %s22, 0
      %p89 = por %p87, %p88
      %p90 = scmp.ne.s32.totalorder %s82, %s84
      %p91 = scmp.eq.s32.totalorder %s27, 1
      %p92 = por %p90, %p91
      %p93 = scmp.ne.s32.totalorder %s84, %s85
      %p94 = scmp.eq.s32.totalorder %s27, 0
      %p95 = por %p93, %p94
      %p96 = scmp.ne.s32.totalorder %s84, %s85
      %p97 = scmp.eq.s32.totalorder %s28, 1
      %p98 = por %p96, %p97
      %p100 = scmp.ne.s32.totalorder %s85, %s99
      %p101 = scmp.eq.s32.totalorder %s28, 0
      %p102 = por %p100, %p101
      %s104 = sadd.s32 %s103, 1
      %p107 = scmp.eq.s32.totalorder %s22, 1
      %p108 = scmp.ne.s32.totalorder %s103, %s105
      %p109 = scmp.eq.s32.totalorder %s22, 0
      %p110 = por %p108, %p109
      %p111 = scmp.ne.s32.totalorder %s103, %s105
      %p112 = scmp.eq.s32.totalorder %s27, 1
      %p113 = por %p111, %p112
      %p114 = scmp.ne.s32.totalorder %s105, %s106
      %p115 = scmp.eq.s32.totalorder %s27, 0
      %p116 = por %p114, %p115
      %p117 = scmp.ne.s32.totalorder %s105, %s106
      %p118 = scmp.eq.s32.totalorder %s28, 1
      %p119 = por %p117, %p118
      %p121 = scmp.ne.s32.totalorder %s106, %s120
      %p122 = scmp.eq.s32.totalorder %s28, 0
      %p123 = por %p121, %p122
      %s125 = sadd.s32 %s124, 1
      %p128 = scmp.eq.s32.totalorder %s22, 1
      %p129 = scmp.ne.s32.totalorder %s124, %s126
      %p130 = scmp.eq.s32.totalorder %s22, 0
      %p131 = por %p129, %p130
      %p132 = scmp.ne.s32.totalorder %s124, %s126
      %p133 = scmp.eq.s32.totalorder %s27, 1
      %p134 = por %p132, %p133
      %p135 = scmp.ne.s32.totalorder %s126, %s127
      %p136 = scmp.eq.s32.totalorder %s27, 0
      %p137 = por %p135, %p136
      %p138 = scmp.ne.s32.totalorder %s126, %s127
      %p139 = scmp.eq.s32.totalorder %s28, 1
      %p140 = por %p138, %p139
      %p142 = scmp.ne.s32.totalorder %s127, %s141
      %p143 = scmp.eq.s32.totalorder %s28, 0
      %p144 = por %p142, %p143
      %s146 = sadd.s32 %s145, 1
      %p149 = scmp.eq.s32.totalorder %s22, 1
      %p150 = scmp.ne.s32.totalorder %s145, %s147
      %p151 = scmp.eq.s32.totalorder %s22, 0
      %p152 = por %p150, %p151
      %p153 = scmp.ne.s32.totalorder %s145, %s147
      %p154 = scmp.eq.s32.totalorder %s27, 1
      %p155 = por %p153, %p154
      %p156 = scmp.ne.s32.totalorder %s147, %s148
      %p157 = scmp.eq.s32.totalorder %s27, 0
      %p158 = por %p156, %p157
      %p159 = scmp.ne.s32.totalorder %s147, %s148
      %p160 = scmp.eq.s32.totalorder %s28, 1
      %p161 = por %p159, %p160
      %p163 = scmp.ne.s32.totalorder %s148, %s162
      %p164 = scmp.eq.s32.totalorder %s28, 0
      %p165 = por %p163, %p164
      %s167 = sadd.s32 %s166, 1
      %p170 = scmp.eq.s32.totalorder %s22, 1
      %p171 = scmp.ne.s32.totalorder %s166, %s168
      %p172 = scmp.eq.s32.totalorder %s22, 0
      %p173 = por %p171, %p172
      %p174 = scmp.ne.s32.totalorder %s166, %s168
      %p175 = scmp.eq.s32.totalorder %s27, 1
      %p176 = por %p174, %p175
      %p177 = scmp.ne.s32.totalorder %s168, %s169
      %p178 = scmp.eq.s32.totalorder %s27, 0
      %p179 = por %p177, %p178
      %p180 = scmp.ne.s32.totalorder %s168, %s169
      %p181 = scmp.eq.s32.totalorder %s28, 1
      %p182 = por %p180, %p181
      %p184 = scmp.ne.s32.totalorder %s169, %s183
      %p185 = scmp.eq.s32.totalorder %s28, 0
      %p186 = por %p184, %p185
      %s188 = sadd.s32 %s187, 1
      %p191 = scmp.eq.s32.totalorder %s22, 1
      %p192 = scmp.ne.s32.totalorder %s187, %s189
      %p193 = scmp.eq.s32.totalorder %s22, 0
      %p194 = por %p192, %p193
      %p195 = scmp.ne.s32.totalorder %s187, %s189
      %p196 = scmp.eq.s32.totalorder %s27, 1
      %p197 = por %p195, %p196
      %p198 = scmp.ne.s32.totalorder %s189, %s190
      %p199 = scmp.eq.s32.totalorder %s27, 0
      %p200 = por %p198, %p199
      %p201 = scmp.ne.s32.totalorder %s189, %s190
      %p202 = scmp.eq.s32.totalorder %s28, 1
      %p203 = por %p201, %p202
      %p205 = scmp.ne.s32.totalorder %s190, %s204
      %p206 = scmp.eq.s32.totalorder %s28, 0
      %p207 = por %p205, %p206
      %s208 = ssub.s32 %s22, %s29
      %p209 = scmp.eq.s32.totalorder %s208, 0
      %s211 = sadd.s32 %s210, 1
      %s212 = scalar_select %p209, %s210, %s211
      %p215 = pneg %p209
      %p216 = scmp.eq.s32.totalorder %s22, 1
      %p217 = por %p215, %p216
      %p218 = scmp.ne.s32.totalorder %s210, %s213
      %p219 = scmp.eq.s32.totalorder %s22, 0
      %p220 = por %p218, %p219
      %p221 = scmp.ne.s32.totalorder %s210, %s213
      %p222 = scmp.eq.s32.totalorder %s27, 1
      %p223 = por %p221, %p222
      %p224 = scmp.ne.s32.totalorder %s213, %s214
      %p225 = scmp.eq.s32.totalorder %s27, 0
      %p226 = por %p224, %p225
      %p227 = scmp.ne.s32.totalorder %s213, %s214
      %p228 = scmp.eq.s32.totalorder %s28, 1
      %p229 = por %p227, %p228
      %p231 = scmp.ne.s32.totalorder %s214, %s230
      %p232 = scmp.eq.s32.totalorder %s28, 0
      %p233 = por %p231, %p232
      %p234 = scmp.le.s32.totalorder 1, %s22
      %p235 = scmp.lt.s32.totalorder %s22, 3
      %p236 = pnand %p234, %p235
      %p237 = pneg %p236
      // Predicated region
      $region9: #{tpu_custom_call.1} parent=5 // pred_check
        _
      $region10: #{tpu_custom_call.1} parent=5 // pred_check_branch
        %239 = sbr.rel (%p236) target = $region12
      $region11: #{tpu_custom_call.1} parent=5 // pred_region
        %s240 = ssub.s32 %s22, 1
        // Predicated region
        $region13: #{tpu_custom_call.1} parent=11 // pred_check
          %p241 = pneg %p95
        $region14: #{tpu_custom_call.1} parent=11 // pred_check_branch
          %243 = sbr.rel (%p241) target = $region16
        $region15: #{tpu_custom_call.1} parent=11 // pred_region
          %s245 = ssub.s32 16, 16
          %246 = vsyncadd [#allocation6], %s245
          %s248 = sshll.u32 [#allocation5], 4
          %s249 = int_to_ptr.vmem [resolvable:$true] %s248
          %251 = dma.hbm_to_vmem [thread:$0]  %s2, 16, %s249, [#allocation6]
        $region16: #{tpu_custom_call.1} parent=11 // pred_fallthru
          _
        // Predicated region
        $region17: #{tpu_custom_call.1} parent=11 // pred_check
          %p252 = pneg %p116
        $region18: #{tpu_custom_call.1} parent=11 // pred_check_branch
          %254 = sbr.rel (%p252) target = $region20
        $region19: #{tpu_custom_call.1} parent=11 // pred_region
          %s256 = ssub.s32 16, 16
          %257 = vsyncadd [#allocation6], %s256
          %s259 = sshll.u32 [#allocation7], 4
          %s260 = int_to_ptr.vmem [resolvable:$true] %s259
          %262 = dma.hbm_to_vmem [thread:$0]  %s3, 16, %s260, [#allocation6]
        $region20: #{tpu_custom_call.1} parent=11 // pred_fallthru
          _
        // Predicated region
        $region21: #{tpu_custom_call.1} parent=11 // pred_check
          %p263 = pneg %p137
        $region22: #{tpu_custom_call.1} parent=11 // pred_check_branch
          %265 = sbr.rel (%p263) target = $region24
        $region23: #{tpu_custom_call.1} parent=11 // pred_region
          _
        $region24: #{tpu_custom_call.1} parent=11 // pred_fallthru
          _
        // Predicated region
        $region25: #{tpu_custom_call.1} parent=11 // pred_check
          %p266 = pneg %p158
        $region26: #{tpu_custom_call.1} parent=11 // pred_check_branch
          %268 = sbr.rel (%p266) target = $region28
        $region27: #{tpu_custom_call.1} parent=11 // pred_region
          _
        $region28: #{tpu_custom_call.1} parent=11 // pred_fallthru
          _
        // Predicated region
        $region29: #{tpu_custom_call.1} parent=11 // pred_check
          %p269 = pneg %p179
        $region30: #{tpu_custom_call.1} parent=11 // pred_check_branch
          %271 = sbr.rel (%p269) target = $region32
        $region31: #{tpu_custom_call.1} parent=11 // pred_region
          %s273 = ssub.s32 5120, 5120
          %274 = vsyncadd [#allocation9], %s273
          %s275 = sshll.u32 [#allocation8], 4
          %s276 = int_to_ptr.vmem [resolvable:$true] %s275
          %281 = dma.hbm_to_vmem [thread:$0]  %s6, 5120, %s276, [#allocation9], 640, 640, 40
        $region32: #{tpu_custom_call.1} parent=11 // pred_fallthru
          _
        // Predicated region
        $region33: #{tpu_custom_call.1} parent=11 // pred_check
          %p282 = pneg %p200
        $region34: #{tpu_custom_call.1} parent=11 // pred_check_branch
          %284 = sbr.rel (%p282) target = $region36
        $region35: #{tpu_custom_call.1} parent=11 // pred_region
          _
        $region36: #{tpu_custom_call.1} parent=11 // pred_fallthru
          _
      $region12: #{tpu_custom_call.1} parent=5 // pred_fallthru
        _
      %p285 = scmp.lt.s32.totalorder %s22, 2
      // Predicated region
      $region37: #{tpu_custom_call.1} parent=5 // pred_check
        %p286 = pneg %p285
      $region38: #{tpu_custom_call.1} parent=5 // pred_check_branch
        %288 = sbr.rel (%p286) target = $region40
      $region39: #{tpu_custom_call.1} parent=5 // pred_region
        // Predicated region
        $region41: #{tpu_custom_call.1} parent=39 // pred_check
          %p289 = pneg %p42
        $region42: #{tpu_custom_call.1} parent=39 // pred_check_branch
          %291 = sbr.rel (%p289) target = $region44
        $region43: #{tpu_custom_call.1} parent=39 // pred_region
          %s292 = sand.u32 %s32, 1
          %s293 = scalar_lea.sflag [#allocation3], %s292
          %s294 = sand.u32 %s32, 1
          %s295 = smul.addr %s294, 64
          %s296 = scalar_lea.vmem [#allocation2], %s295
          %s298 = ssub.s32 1024, 1024
          %299 = vsyncadd %s293, %s298
          %s300 = smul.addr %s22, 8
          %s301 = smul.addr %s300, 128
          %s302 = scalar_lea.hbm %s0, %s301
          %s303 = sshll.u32 %s296, 4
          %s304 = int_to_ptr.vmem [resolvable:$true] %s303
          %309 = dma.hbm_to_vmem [thread:$0]  %s302, 1024, %s304, %s293, 128, 128, 8
        $region44: #{tpu_custom_call.1} parent=39 // pred_fallthru
          _
        // Predicated region
        $region45: #{tpu_custom_call.1} parent=39 // pred_check
          %p310 = pneg %p68
        $region46: #{tpu_custom_call.1} parent=39 // pred_check_branch
          %312 = sbr.rel (%p310) target = $region48
        $region47: #{tpu_custom_call.1} parent=39 // pred_region
          %p313 = scmp.lt.s32.totalorder %s22, 1
          %s314 = scalar_select %p313, %s22, 1
          %s315 = smul.addr %s314, 8
          %s316 = scalar_lea.vmem %s1, %s315
        $region48: #{tpu_custom_call.1} parent=39 // pred_fallthru
          _
      $region40: #{tpu_custom_call.1} parent=5 // pred_fallthru
        _
      %p317 = scmp.le.s32.totalorder 1, %s22
      %p318 = scmp.lt.s32.totalorder %s22, 3
      %p319 = pnand %p317, %p318
      %p320 = pneg %p319
      // Predicated region
      $region49: #{tpu_custom_call.1} parent=5 // pred_check
        _
      $region50: #{tpu_custom_call.1} parent=5 // pred_check_branch
        %322 = sbr.rel (%p319) target = $region52
      $region51: #{tpu_custom_call.1} parent=5 // pred_region
        %s323 = ssub.s32 %s22, 1
        %s324 = sand.u32 %s35, 1
        %s325 = scalar_lea.sflag [#allocation3], %s324
        %s326 = sand.u32 %s35, 1
        %s327 = smul.addr %s326, 64
        %s328 = scalar_lea.vmem [#allocation2], %s327
        // Predicated region
        $region53: #{tpu_custom_call.1} parent=51 // pred_check
          %p329 = pneg %p48
        $region54: #{tpu_custom_call.1} parent=51 // pred_check_branch
          %331 = sbr.rel (%p329) target = $region56
        $region55: #{tpu_custom_call.1} parent=51 // pred_region
          %332 = dma.done %s325, 1024
        $region56: #{tpu_custom_call.1} parent=51 // pred_fallthru
          _
        // Predicated region
        $region57: #{tpu_custom_call.1} parent=51 // pred_check
          %p333 = pneg %p95
        $region58: #{tpu_custom_call.1} parent=51 // pred_check_branch
          %335 = sbr.rel (%p333) target = $region60
        $region59: #{tpu_custom_call.1} parent=51 // pred_region
          %336 = dma.done [#allocation6], 16
        $region60: #{tpu_custom_call.1} parent=51 // pred_fallthru
          _
        // Predicated region
        $region61: #{tpu_custom_call.1} parent=51 // pred_check
          %p337 = pneg %p116
        $region62: #{tpu_custom_call.1} parent=51 // pred_check_branch
          %339 = sbr.rel (%p337) target = $region64
        $region63: #{tpu_custom_call.1} parent=51 // pred_region
          %340 = dma.done [#allocation6], 16
        $region64: #{tpu_custom_call.1} parent=51 // pred_fallthru
          _
        // Predicated region
        $region65: #{tpu_custom_call.1} parent=51 // pred_check
          %p341 = pneg %p179
        $region66: #{tpu_custom_call.1} parent=51 // pred_check_branch
          %343 = sbr.rel (%p341) target = $region68
        $region67: #{tpu_custom_call.1} parent=51 // pred_region
          %344 = dma.done [#allocation9], 5120
        $region68: #{tpu_custom_call.1} parent=51 // pred_fallthru
          _
        %s345 = sand.u32 %s35, 1
        %s346 = scalar_lea.sflag [#allocation3], %s345
        %s347 = sand.u32 %s35, 1
        %s348 = smul.addr %s347, 64
        %s349 = scalar_lea.vmem [#allocation2], %s348
        %p350 = pneg %p48
        %p351 = pneg %p45
        %p352 = scmp.lt.s32.totalorder %s27, 1
        %s353 = scalar_select %p352, %s27, 1
        %s354 = smul.addr %s353, 8
        %s355 = scalar_lea.vmem %s1, %s354
        %p356 = pneg %p74
        %p357 = pneg %p71
        %p358 = pneg %p95
        %p359 = pneg %p92
        %p360 = pneg %p116
        %p361 = pneg %p113
        %p362 = pneg %p137
        %p363 = pneg %p134
        %p364 = pneg %p158
        %p365 = pneg %p155
        %p366 = pneg %p179
        %p367 = pneg %p176
        %p368 = pneg %p200
        %p369 = pneg %p197
        %p370 = pneg %p226
        %p371 = pneg %p223
        %s372 = sand.u32 %s213, 1
        %s373 = scalar_lea.sflag [#allocation4], %s372
        %s374 = sand.u32 %s213, 1
        %s375 = smul.addr %s374, 64
        %s376 = scalar_lea.vmem [#allocation10], %s375
        %p377 = scmp.lt.s32.totalorder %s27, 1
        %s378 = scalar_select %p377, %s27, 1
        %s379 = smul.addr %s378, 8
        %s380 = scalar_lea.vmem %s1, %s379
        %v381 = vld [vmem:[%s328] sm:$0xff]
        %v382 = vld [vmem:[%s328 + $0x8] sm:$0xff]
        %v383 = vld [vmem:[%s328 + $0x10] sm:$0xff]
        %v384 = vld [vmem:[%s328 + $0x18] sm:$0xff]
        %v385 = vld [vmem:[%s328 + $0x20] sm:$0xff]
        %v386 = vld [vmem:[%s328 + $0x28] sm:$0xff]
        %v387 = vld [vmem:[%s328 + $0x30] sm:$0xff]
        %v388 = vld [vmem:[%s328 + $0x38] sm:$0xff]
        %v389 = vld [vmem:[%s380] sm:$0xff]
        %vm390 = vcmask 523264
        %v391 = vsel %vm390, %v389, 0.0
        %392 = vadd.xlane.f32.xlu0 %v391
        %v393 = vpop.xlane.xlu0 %392
        %v394 = vrcp.pop 64.0
        %v395 = vmul.f32 %v393, %v394
        %v396 = vsub.f32 %v389, %v395
        %v397 = vmul.f32 %v396, %v396
        %v398 = vsel %vm390, %v397, 0.0
        %399 = vadd.xlane.f32.xlu0 %v398
        %v400 = vpop.xlane.xlu0 %399
        %v401 = vmul.f32 %v400, %v394
        %v402 = vadd.f32 %v401, 1e-05
        %v403 = vrsqrt.pop %v402
        %v404 = vmul.f32 %v396, %v403
        %v405 = vld [vmem:[#allocation5] sm:$0x1]
        %v407 = vlaneseq
        %v408 = vshrl.u32 %v407, 7
        %v409 = vsub.s32 0, %v408
        %v410 = vrot.slane %v405, %v409
        %v412 = vmul.f32 %v404, %v410
        %v413 = vld [vmem:[#allocation7] sm:$0x1]
        %v415 = vlaneseq
        %v416 = vshrl.u32 %v415, 7
        %v417 = vsub.s32 0, %v416
        %v418 = vrot.slane %v413, %v417
        %v420 = vadd.f32 %v412, %v418
        %v421 = vld [vmem:[%s4] sm:$0xff]
        %v422 = vld [vmem:[%s4 + $0x8] sm:$0xff]
        %v423 = vld [vmem:[%s4 + $0x10] sm:$0xff]
        %v424 = vld [vmem:[%s4 + $0x18] sm:$0xff]
        %v425 = vld [vmem:[%s4 + $0x20] sm:$0xff]
        %v426 = vld [vmem:[%s4 + $0x28] sm:$0xff]
        %v427 = vld [vmem:[%s4 + $0x30] sm:$0xff]
        %v428 = vld [vmem:[%s4 + $0x38] sm:$0xff]
        %v429 = vld [vmem:[%s5] sm:$0x1]
        %v431 = vlaneseq
        %v432 = vshrl.u32 %v431, 7
        %v433 = vsub.s32 0, %v432
        %v434 = vrot.slane %v429, %v433
        %v437 = vsel %vm390, %v389, 0
        %439 = vmatprep.subr.mxu0 0.0
        %440 = vmatpush1.msra.mxu0 %v421
        %441 = vmatprep.subr.mxu0 0.0
        %442 = vmatpush1.msra.mxu0 %v422
        %443 = vmatprep.subr.mxu0 0.0
        %444 = vmatpush1.msra.mxu0 %v423
        %445 = vmatprep.subr.mxu0 0.0
        %446 = vmatpush1.msra.mxu0 %v424
        %447 = vmatprep.subr.mxu0 0.0
        %448 = vmatpush1.msra.mxu0 %v425
        %449 = vmatprep.subr.mxu0 0.0
        %450 = vmatpush1.msra.mxu0 %v426
        %451 = vmatprep.subr.mxu0 0.0
        %452 = vmatpush1.msra.mxu0 %v427
        %453 = vmatprep.subr.mxu0 0.0
        %454 = vmatpush1.msra.mxu0 %v428
        %455 = vmatprep.subr.mxu0 0.0
        %456 = vmatpush1.msra.mxu0 0.0
        %457 = vmatprep.subr.mxu0 0.0
        %458 = vmatpush1.msra.mxu0 0.0
        %459 = vmatprep.subr.mxu0 0.0
        %460 = vmatpush1.msra.mxu0 0.0
        %461 = vmatprep.subr.mxu0 0.0
        %462 = vmatpush1.msra.mxu0 0.0
        %463 = vmatprep.subr.mxu0 0.0
        %464 = vmatpush1.msra.mxu0 0.0
        %465 = vmatprep.subr.mxu0 0.0
        %466 = vmatpush1.msra.mxu0 0.0
        %467 = vmatprep.subr.mxu0 0.0
        %468 = vmatpush1.msra.mxu0 0.0
        %469 = vmatprep.subr.mxu0 0.0
        %470 = vmatpush1.msra.mxu0 0.0
        %471 = vmatprep.subr.mxu0 0.0
        %472 = vmatpush1.msra.mxu0 0.0
        %473 = vmatprep.subr.mxu0 0.0
        %474 = vmatpush1.msra.mxu0 0.0
        %475 = vmatprep.subr.mxu0 0.0
        %476 = vmatpush1.msra.mxu0 0.0
        %477 = vmatprep.subr.mxu0 0.0
        %478 = vmatpush1.msra.mxu0 0.0
        %479 = vmatprep.subr.mxu0 0.0
        %480 = vmatpush1.msra.mxu0 0.0
        %481 = vmatprep.subr.mxu0 0.0
        %482 = vmatpush1.msra.mxu0 0.0
        %483 = vmatprep.subr.mxu0 0.0
        %484 = vmatpush1.msra.mxu0 0.0
        %485 = vmatprep.subr.mxu0 0.0
        %486 = vmatpush1.msra.mxu0 0.0
        %487 = vmatprep.subr.mxu0 0.0
        %488 = vmatpush1.msra.mxu0 0.0
        %489 = vmatprep.subr.mxu0 0.0
        %490 = vmatpush1.msra.mxu0 0.0
        %491 = vmatprep.subr.mxu0 0.0
        %492 = vmatpush1.msra.mxu0 0.0
        %493 = vmatprep.subr.mxu0 0.0
        %494 = vmatpush1.msra.mxu0 0.0
        %495 = vmatprep.subr.mxu0 0.0
        %496 = vmatpush1.msra.mxu0 0.0
        %497 = vmatprep.subr.mxu0 0.0
        %498 = vmatpush1.msra.mxu0 0.0
        %499 = vmatprep.subr.mxu0 0.0
        %500 = vmatpush1.msra.mxu0 0.0
        %501 = vmatprep.subr.mxu0 0.0
        %502 = vmatpush1.msra.mxu0 0.0
        %503 = vmatprep.mubr.f32.mxu0 0.0
        %504 = vmatmul.mubr.f32.gmra.mrb[0].mxu0 %v437
        %v505 = vpop.f32.mrb[0].mxu0
        %v506 = vadd.f32 %v434, %v505
        %v507 = vpop.f32.mrb[0].mxu0
        %508 = vdwg.mxu0
        %v509 = vtanh.pop %v506
        %v510 = vxor.u32 %v506, 2147483648
        %v511 = vmul.f32 %v510, 1.442695
        %v512 = vpow.pop %v511
        %v513 = vadd.f32 %v512, 1.0
        %v514 = vrcp.pop %v513
        %v515 = vmul.f32 1.0, %v514
        %517 = vrot.lane.b32.xlu0 %v515, 64
        %v518 = vpop.permute.xlu0 %517
        %v520 = vmul.f32 %v509, %v518
        %v522 = vsel %vm390, %v420, 0
        %524 = vmatprep.subr.mxu0 0.0
        %525 = vmatpush1.msra.mxu0 %v381
        %526 = vmatprep.subr.mxu0 0.0
        %527 = vmatpush1.msra.mxu0 %v382
        %528 = vmatprep.subr.mxu0 0.0
        %529 = vmatpush1.msra.mxu0 %v383
        %530 = vmatprep.subr.mxu0 0.0
        %531 = vmatpush1.msra.mxu0 %v384
        %532 = vmatprep.subr.mxu0 0.0
        %533 = vmatpush1.msra.mxu0 %v385
        %534 = vmatprep.subr.mxu0 0.0
        %535 = vmatpush1.msra.mxu0 %v386
        %536 = vmatprep.subr.mxu0 0.0
        %537 = vmatpush1.msra.mxu0 %v387
        %538 = vmatprep.subr.mxu0 0.0
        %539 = vmatpush1.msra.mxu0 %v388
        %540 = vmatprep.subr.mxu0 0.0
        %541 = vmatpush1.msra.mxu0 0.0
        %542 = vmatprep.subr.mxu0 0.0
        %543 = vmatpush1.msra.mxu0 0.0
        %544 = vmatprep.subr.mxu0 0.0
        %545 = vmatpush1.msra.mxu0 0.0
        %546 = vmatprep.subr.mxu0 0.0
        %547 = vmatpush1.msra.mxu0 0.0
        %548 = vmatprep.subr.mxu0 0.0
        %549 = vmatpush1.msra.mxu0 0.0
        %550 = vmatprep.subr.mxu0 0.0
        %551 = vmatpush1.msra.mxu0 0.0
        %552 = vmatprep.subr.mxu0 0.0
        %553 = vmatpush1.msra.mxu0 0.0
        %554 = vmatprep.subr.mxu0 0.0
        %555 = vmatpush1.msra.mxu0 0.0
        %556 = vmatprep.subr.mxu0 0.0
        %557 = vmatpush1.msra.mxu0 0.0
        %558 = vmatprep.subr.mxu0 0.0
        %559 = vmatpush1.msra.mxu0 0.0
        %560 = vmatprep.subr.mxu0 0.0
        %561 = vmatpush1.msra.mxu0 0.0
        %562 = vmatprep.subr.mxu0 0.0
        %563 = vmatpush1.msra.mxu0 0.0
        %564 = vmatprep.subr.mxu0 0.0
        %565 = vmatpush1.msra.mxu0 0.0
        %566 = vmatprep.subr.mxu0 0.0
        %567 = vmatpush1.msra.mxu0 0.0
        %568 = vmatprep.subr.mxu0 0.0
        %569 = vmatpush1.msra.mxu0 0.0
        %570 = vmatprep.subr.mxu0 0.0
        %571 = vmatpush1.msra.mxu0 0.0
        %572 = vmatprep.subr.mxu0 0.0
        %573 = vmatpush1.msra.mxu0 0.0
        %574 = vmatprep.subr.mxu0 0.0
        %575 = vmatpush1.msra.mxu0 0.0
        %576 = vmatprep.subr.mxu0 0.0
        %577 = vmatpush1.msra.mxu0 0.0
        %578 = vmatprep.subr.mxu0 0.0
        %579 = vmatpush1.msra.mxu0 0.0
        %580 = vmatprep.subr.mxu0 0.0
        %581 = vmatpush1.msra.mxu0 0.0
        %582 = vmatprep.subr.mxu0 0.0
        %583 = vmatpush1.msra.mxu0 0.0
        %584 = vmatprep.subr.mxu0 0.0
        %585 = vmatpush1.msra.mxu0 0.0
        %586 = vmatprep.subr.mxu0 0.0
        %587 = vmatpush1.msra.mxu0 0.0
        %588 = vmatprep.mubr.f32.mxu0 0.0
        %589 = vmatmul.mubr.f32.gmra.mrb[0].mxu0 %v522
        %v590 = vpop.f32.mrb[0].mxu0
        %v591 = vadd.f32 0.0, %v590
        %v592 = vpop.f32.mrb[0].mxu0
        %593 = vdwg.mxu0
        %v594 = vsel %vm390, %v591, -inf
        %v595 = vrot.slane %v594, 4
        %v596 = vmax.f32 %v594, %v595
        %v597 = vrot.slane %v596, 2
        %v598 = vmax.f32 %v596, %v597
        %v599 = vrot.slane %v598, 1
        %v600 = vmax.f32 %v598, %v599
        %v601 = vsub.f32 %v591, %v600
        %v602 = vmul.f32 %v601, 1.442695
        %v603 = vpow.pop %v602
        %v604 = vsel %vm390, %v603, 0.0
        %v605 = vrot.slane %v604, 4
        %v606 = vadd.f32 %v604, %v605
        %v607 = vrot.slane %v606, 2
        %v608 = vadd.f32 %v606, %v607
        %v609 = vrot.slane %v608, 1
        %v610 = vadd.f32 %v608, %v609
        %v611 = vrcp.pop %v610
        %v612 = vmul.f32 %v603, %v611
        %613 = vxpose.xlu0.b32.start [1/16] %v520, 128
        %614 = vxpose.xlu0.b32.cont [2/16] 0.0, 128
        %615 = vxpose.xlu0.b32.cont [3/16] 0.0, 128
        %616 = vxpose.xlu0.b32.cont [4/16] 0.0, 128
        %617 = vxpose.xlu0.b32.cont [5/16] 0.0, 128
        %618 = vxpose.xlu0.b32.cont [6/16] 0.0, 128
        %619 = vxpose.xlu0.b32.cont [7/16] 0.0, 128
        %620 = vxpose.xlu0.b32.cont [8/16] 0.0, 128
        %621 = vxpose.xlu0.b32.cont [9/16] 0.0, 128
        %622 = vxpose.xlu0.b32.cont [10/16] 0.0, 128
        %623 = vxpose.xlu0.b32.cont [11/16] 0.0, 128
        %624 = vxpose.xlu0.b32.cont [12/16] 0.0, 128
        %625 = vxpose.xlu0.b32.cont [13/16] 0.0, 128
        %626 = vxpose.xlu0.b32.cont [14/16] 0.0, 128
        %627 = vxpose.xlu0.b32.cont [15/16] 0.0, 128
        %628 = vxpose.xlu0.b32.end [16/16] 0.0, 128
        %v629 = vpop.trf.xlu0
        %v630 = vpop.trf.xlu0
        %v631 = vpop.trf.xlu0
        %v632 = vpop.trf.xlu0
        %v633 = vpop.trf.xlu0
        %v634 = vpop.trf.xlu0
        %v635 = vpop.trf.xlu0
        %v636 = vpop.trf.xlu0
        %v637 = vpop.trf.xlu0
        %v638 = vpop.trf.xlu0
        %v639 = vpop.trf.xlu0
        %v640 = vpop.trf.xlu0
        %v641 = vpop.trf.xlu0
        %v642 = vpop.trf.xlu0
        %v643 = vpop.trf.xlu0
        %v644 = vpop.trf.xlu0
        %vm645 = vcmask 64512
        %v647 = vsel %vm645, %v629, 0
        %v650 = vsel %vm645, %v630, 0
        %v653 = vsel %vm645, %v631, 0
        %v656 = vsel %vm645, %v632, 0
        %v659 = vsel %vm645, %v633, 0
        %v662 = vsel %vm645, %v634, 0
        %v665 = vsel %vm645, %v635, 0
        %v668 = vsel %vm645, %v636, 0
        %670 = vmatprep.subr.mxu0 0.0
        %671 = vmatpush1.msra.mxu0 %v612
        %672 = vmatprep.subr.mxu0 0.0
        %673 = vmatpush1.msra.mxu0 0.0
        %674 = vmatprep.subr.mxu0 0.0
        %675 = vmatpush1.msra.mxu0 0.0
        %676 = vmatprep.subr.mxu0 0.0
        %677 = vmatpush1.msra.mxu0 0.0
        %678 = vmatprep.subr.mxu0 0.0
        %679 = vmatpush1.msra.mxu0 0.0
        %680 = vmatprep.subr.mxu0 0.0
        %681 = vmatpush1.msra.mxu0 0.0
        %682 = vmatprep.subr.mxu0 0.0
        %683 = vmatpush1.msra.mxu0 0.0
        %684 = vmatprep.subr.mxu0 0.0
        %685 = vmatpush1.msra.mxu0 0.0
        %686 = vmatprep.subr.mxu0 0.0
        %687 = vmatpush1.msra.mxu0 0.0
        %688 = vmatprep.subr.mxu0 0.0
        %689 = vmatpush1.msra.mxu0 0.0
        %690 = vmatprep.subr.mxu0 0.0
        %691 = vmatpush1.msra.mxu0 0.0
        %692 = vmatprep.subr.mxu0 0.0
        %693 = vmatpush1.msra.mxu0 0.0
        %694 = vmatprep.subr.mxu0 0.0
        %695 = vmatpush1.msra.mxu0 0.0
        %696 = vmatprep.subr.mxu0 0.0
        %697 = vmatpush1.msra.mxu0 0.0
        %698 = vmatprep.subr.mxu0 0.0
        %699 = vmatpush1.msra.mxu0 0.0
        %700 = vmatprep.subr.mxu0 0.0
        %701 = vmatpush1.msra.mxu0 0.0
        %702 = vmatprep.subr.mxu0 0.0
        %703 = vmatpush1.msra.mxu0 0.0
        %704 = vmatprep.subr.mxu0 0.0
        %705 = vmatpush1.msra.mxu0 0.0
        %706 = vmatprep.subr.mxu0 0.0
        %707 = vmatpush1.msra.mxu0 0.0
        %708 = vmatprep.subr.mxu0 0.0
        %709 = vmatpush1.msra.mxu0 0.0
        %710 = vmatprep.subr.mxu0 0.0
        %711 = vmatpush1.msra.mxu0 0.0
        %712 = vmatprep.subr.mxu0 0.0
        %713 = vmatpush1.msra.mxu0 0.0
        %714 = vmatprep.subr.mxu0 0.0
        %715 = vmatpush1.msra.mxu0 0.0
        %716 = vmatprep.subr.mxu0 0.0
        %717 = vmatpush1.msra.mxu0 0.0
        %718 = vmatprep.subr.mxu0 0.0
        %719 = vmatpush1.msra.mxu0 0.0
        %720 = vmatprep.subr.mxu0 0.0
        %721 = vmatpush1.msra.mxu0 0.0
        %722 = vmatprep.subr.mxu0 0.0
        %723 = vmatpush1.msra.mxu0 0.0
        %724 = vmatprep.subr.mxu0 0.0
        %725 = vmatpush1.msra.mxu0 0.0
        %726 = vmatprep.subr.mxu0 0.0
        %727 = vmatpush1.msra.mxu0 0.0
        %728 = vmatprep.subr.mxu0 0.0
        %729 = vmatpush1.msra.mxu0 0.0
        %730 = vmatprep.subr.mxu0 0.0
        %731 = vmatpush1.msra.mxu0 0.0
        %732 = vmatprep.subr.mxu0 0.0
        %733 = vmatpush1.msra.mxu0 0.0
        %734 = vmatprep.mubr.f32.mxu0 0.0
        %735 = vmatmul.mubr.f32.gmra.mrb[0].mxu0 %v647
        %v736 = vpop.f32.mrb[0].mxu0
        %v737 = vadd.f32 0.0, %v736
        %v738 = vpop.f32.mrb[0].mxu0
        %739 = vmatprep.mubr.f32.mxu0 0.0
        %740 = vmatmul.mubr.f32.gmra.mrb[0].mxu0 %v650
        %v741 = vpop.f32.mrb[0].mxu0
        %v742 = vadd.f32 0.0, %v741
        %v743 = vpop.f32.mrb[0].mxu0
        %744 = vmatprep.mubr.f32.mxu0 0.0
        %745 = vmatmul.mubr.f32.gmra.mrb[0].mxu0 %v653
        %v746 = vpop.f32.mrb[0].mxu0
        %v747 = vadd.f32 0.0, %v746
        %v748 = vpop.f32.mrb[0].mxu0
        %749 = vmatprep.mubr.f32.mxu0 0.0
        %750 = vmatmul.mubr.f32.gmra.mrb[0].mxu0 %v656
        %v751 = vpop.f32.mrb[0].mxu0
        %v752 = vadd.f32 0.0, %v751
        %v753 = vpop.f32.mrb[0].mxu0
        %754 = vmatprep.mubr.f32.mxu0 0.0
        %755 = vmatmul.mubr.f32.gmra.mrb[0].mxu0 %v659
        %v756 = vpop.f32.mrb[0].mxu0
        %v757 = vadd.f32 0.0, %v756
        %v758 = vpop.f32.mrb[0].mxu0
        %759 = vmatprep.mubr.f32.mxu0 0.0
        %760 = vmatmul.mubr.f32.gmra.mrb[0].mxu0 %v662
        %v761 = vpop.f32.mrb[0].mxu0
        %v762 = vadd.f32 0.0, %v761
        %v763 = vpop.f32.mrb[0].mxu0
        %764 = vmatprep.mubr.f32.mxu0 0.0
        %765 = vmatmul.mubr.f32.gmra.mrb[0].mxu0 %v665
        %v766 = vpop.f32.mrb[0].mxu0
        %v767 = vadd.f32 0.0, %v766
        %v768 = vpop.f32.mrb[0].mxu0
        %769 = vmatprep.mubr.f32.mxu0 0.0
        %770 = vmatmul.mubr.f32.gmra.mrb[0].mxu0 %v668
        %v771 = vpop.f32.mrb[0].mxu0
        %v772 = vadd.f32 0.0, %v771
        %v773 = vpop.f32.mrb[0].mxu0
        %774 = vdwg.mxu0
        %783 = vrot.lane.b32.xlu0 %v737, 9
        %v784 = vpop.permute.xlu0 %783
        %785 = vrot.lane.b32.xlu0 %v742, 9
        %v786 = vpop.permute.xlu0 %785
        %787 = vrot.lane.b32.xlu0 %v747, 9
        %v788 = vpop.permute.xlu0 %787
        %789 = vrot.lane.b32.xlu0 %v752, 9
        %v790 = vpop.permute.xlu0 %789
        %791 = vrot.lane.b32.xlu0 %v757, 9
        %v792 = vpop.permute.xlu0 %791
        %793 = vrot.lane.b32.xlu0 %v762, 9
        %v794 = vpop.permute.xlu0 %793
        %795 = vrot.lane.b32.xlu0 %v767, 9
        %v796 = vpop.permute.xlu0 %795
        %797 = vrot.lane.b32.xlu0 %v772, 9
        %v798 = vpop.permute.xlu0 %797
        %vm807 = vcmask 72704
        %v808 = vsel %vm807, 0.0, %v784
        %v809 = vsel %vm807, 0.0, %v786
        %v810 = vsel %vm807, 0.0, %v788
        %v811 = vsel %vm807, 0.0, %v790
        %v812 = vsel %vm807, 0.0, %v792
        %v813 = vsel %vm807, 0.0, %v794
        %v814 = vsel %vm807, 0.0, %v796
        %v815 = vsel %vm807, 0.0, %v798
        %vm816 = vcmask 596992
        %v817 = vsel %vm816, %v808, 0.0
        %v818 = vsel %vm816, %v809, 0.0
        %v819 = vsel %vm816, %v810, 0.0
        %v820 = vsel %vm816, %v811, 0.0
        %v821 = vsel %vm816, %v812, 0.0
        %v822 = vsel %vm816, %v813, 0.0
        %v823 = vsel %vm816, %v814, 0.0
        %v824 = vsel %vm816, %v815, 0.0
        %v825 = vlaneseq
        %v826 = vand.u32 %v825, 127
        %vm827 = vcmp.lt.s32.totalorder %v826, 0
        %v828 = vsub.s32 0, %v826
        %v829 = vsel %vm827, %v828, %v826
        %v830 = vshrl.u32 %v829, 3
        %v831 = vand.u32 %v829, 7
        %v832 = vsub.s32 0, %v831
        %v833 = vsel %vm827, %v832, %v831
        %vm834 = vcmp.ne.s32.totalorder %v833, 0
        %vm835 = vcmp.lt.s32.totalorder %v833, 0
        %vm836 = vmand %vm835, %vm834
        %v837 = vadd.s32 %v833, 8
        %v838 = vsel %vm836, %v837, %v833
        %vm839 = vcmp.ge.s32.totalorder %v838, 1
        %vm840 = vcmp.le.s32.totalorder %v838, 6
        %v841 = vsel %vm839, 1, 0
        %vm842 = vcmp.eq.s32.totalorder %v841, 1
        %v843 = vsel %vm842, %v817, 0.0
        %v844 = vsel %vm842, %v818, 0.0
        %v845 = vsel %vm842, %v819, 0.0
        %v846 = vsel %vm842, %v820, 0.0
        %v847 = vsel %vm842, %v821, 0.0
        %v848 = vsel %vm842, %v822, 0.0
        %v849 = vsel %vm842, %v823, 0.0
        %v850 = vsel %vm842, %v824, 0.0
        %v851 = vsel %vm840, 1, 0
        %vm852 = vcmp.eq.s32.totalorder %v851, 1
        %861 = vrot.lane.b32.xlu0 %v817, 126
        %v862 = vpop.permute.xlu0 %861
        %863 = vrot.lane.b32.xlu0 %v818, 126
        %v864 = vpop.permute.xlu0 %863
        %865 = vrot.lane.b32.xlu0 %v819, 126
        %v866 = vpop.permute.xlu0 %865
        %867 = vrot.lane.b32.xlu0 %v820, 126
        %v868 = vpop.permute.xlu0 %867
        %869 = vrot.lane.b32.xlu0 %v821, 126
        %v870 = vpop.permute.xlu0 %869
        %871 = vrot.lane.b32.xlu0 %v822, 126
        %v872 = vpop.permute.xlu0 %871
        %873 = vrot.lane.b32.xlu0 %v823, 126
        %v874 = vpop.permute.xlu0 %873
        %875 = vrot.lane.b32.xlu0 %v824, 126
        %v876 = vpop.permute.xlu0 %875
        %v885 = vsel %vm852, %v862, 0.0
        %v886 = vsel %vm852, %v864, 0.0
        %v887 = vsel %vm852, %v866, 0.0
        %v888 = vsel %vm852, %v868, 0.0
        %v889 = vsel %vm852, %v870, 0.0
        %v890 = vsel %vm852, %v872, 0.0
        %v891 = vsel %vm852, %v874, 0.0
        %v892 = vsel %vm852, %v876, 0.0
        %893 = vrot.lane.b32.xlu0 %v817, 120
        %v894 = vpop.permute.xlu0 %893
        %895 = vrot.lane.b32.xlu0 %v818, 120
        %v896 = vpop.permute.xlu0 %895
        %897 = vrot.lane.b32.xlu0 %v819, 120
        %v898 = vpop.permute.xlu0 %897
        %899 = vrot.lane.b32.xlu0 %v820, 120
        %v900 = vpop.permute.xlu0 %899
        %901 = vrot.lane.b32.xlu0 %v821, 120
        %v902 = vpop.permute.xlu0 %901
        %903 = vrot.lane.b32.xlu0 %v822, 120
        %v904 = vpop.permute.xlu0 %903
        %905 = vrot.lane.b32.xlu0 %v823, 120
        %v906 = vpop.permute.xlu0 %905
        %907 = vrot.lane.b32.xlu0 %v824, 120
        %v908 = vpop.permute.xlu0 %907
        %v917 = vsel %vm842, %v894, 0.0
        %v918 = vsel %vm842, %v896, 0.0
        %v919 = vsel %vm842, %v898, 0.0
        %v920 = vsel %vm842, %v900, 0.0
        %v921 = vsel %vm842, %v902, 0.0
        %v922 = vsel %vm842, %v904, 0.0
        %v923 = vsel %vm842, %v906, 0.0
        %v924 = vsel %vm842, %v908, 0.0
        %925 = vrot.lane.b32.xlu0 %v817, 118
        %v926 = vpop.permute.xlu0 %925
        %927 = vrot.lane.b32.xlu0 %v818, 118
        %v928 = vpop.permute.xlu0 %927
        %929 = vrot.lane.b32.xlu0 %v819, 118
        %v930 = vpop.permute.xlu0 %929
        %931 = vrot.lane.b32.xlu0 %v820, 118
        %v932 = vpop.permute.xlu0 %931
        %933 = vrot.lane.b32.xlu0 %v821, 118
        %v934 = vpop.permute.xlu0 %933
        %935 = vrot.lane.b32.xlu0 %v822, 118
        %v936 = vpop.permute.xlu0 %935
        %937 = vrot.lane.b32.xlu0 %v823, 118
        %v938 = vpop.permute.xlu0 %937
        %939 = vrot.lane.b32.xlu0 %v824, 118
        %v940 = vpop.permute.xlu0 %939
        %v949 = vsel %vm852, %v926, 0.0
        %v950 = vsel %vm852, %v928, 0.0
        %v951 = vsel %vm852, %v930, 0.0
        %v952 = vsel %vm852, %v932, 0.0
        %v953 = vsel %vm852, %v934, 0.0
        %v954 = vsel %vm852, %v936, 0.0
        %v955 = vsel %vm852, %v938, 0.0
        %v956 = vsel %vm852, %v940, 0.0
        %957 = vrot.lane.b32.xlu0 %v817, 112
        %v958 = vpop.permute.xlu0 %957
        %959 = vrot.lane.b32.xlu0 %v818, 112
        %v960 = vpop.permute.xlu0 %959
        %961 = vrot.lane.b32.xlu0 %v819, 112
        %v962 = vpop.permute.xlu0 %961
        %963 = vrot.lane.b32.xlu0 %v820, 112
        %v964 = vpop.permute.xlu0 %963
        %965 = vrot.lane.b32.xlu0 %v821, 112
        %v966 = vpop.permute.xlu0 %965
        %967 = vrot.lane.b32.xlu0 %v822, 112
        %v968 = vpop.permute.xlu0 %967
        %969 = vrot.lane.b32.xlu0 %v823, 112
        %v970 = vpop.permute.xlu0 %969
        %971 = vrot.lane.b32.xlu0 %v824, 112
        %v972 = vpop.permute.xlu0 %971
        %v981 = vsel %vm842, %v958, 0.0
        %v982 = vsel %vm842, %v960, 0.0
        %v983 = vsel %vm842, %v962, 0.0
        %v984 = vsel %vm842, %v964, 0.0
        %v985 = vsel %vm842, %v966, 0.0
        %v986 = vsel %vm842, %v968, 0.0
        %v987 = vsel %vm842, %v970, 0.0
        %v988 = vsel %vm842, %v972, 0.0
        %989 = vrot.lane.b32.xlu0 %v817, 110
        %v990 = vpop.permute.xlu0 %989
        %991 = vrot.lane.b32.xlu0 %v818, 110
        %v992 = vpop.permute.xlu0 %991
        %993 = vrot.lane.b32.xlu0 %v819, 110
        %v994 = vpop.permute.xlu0 %993
        %995 = vrot.lane.b32.xlu0 %v820, 110
        %v996 = vpop.permute.xlu0 %995
        %997 = vrot.lane.b32.xlu0 %v821, 110
        %v998 = vpop.permute.xlu0 %997
        %999 = vrot.lane.b32.xlu0 %v822, 110
        %v1000 = vpop.permute.xlu0 %999
        %1001 = vrot.lane.b32.xlu0 %v823, 110
        %v1002 = vpop.permute.xlu0 %1001
        %1003 = vrot.lane.b32.xlu0 %v824, 110
        %v1004 = vpop.permute.xlu0 %1003
        %v1013 = vsel %vm852, %v990, 0.0
        %v1014 = vsel %vm852, %v992, 0.0
        %v1015 = vsel %vm852, %v994, 0.0
        %v1016 = vsel %vm852, %v996, 0.0
        %v1017 = vsel %vm852, %v998, 0.0
        %v1018 = vsel %vm852, %v1000, 0.0
        %v1019 = vsel %vm852, %v1002, 0.0
        %v1020 = vsel %vm852, %v1004, 0.0
        %1021 = vrot.lane.b32.xlu0 %v817, 127
        %v1022 = vpop.permute.xlu0 %1021
        %1023 = vrot.lane.b32.xlu0 %v818, 127
        %v1024 = vpop.permute.xlu0 %1023
        %1025 = vrot.lane.b32.xlu0 %v819, 127
        %v1026 = vpop.permute.xlu0 %1025
        %1027 = vrot.lane.b32.xlu0 %v820, 127
        %v1028 = vpop.permute.xlu0 %1027
        %1029 = vrot.lane.b32.xlu0 %v821, 127
        %v1030 = vpop.permute.xlu0 %1029
        %1031 = vrot.lane.b32.xlu0 %v822, 127
        %v1032 = vpop.permute.xlu0 %1031
        %1033 = vrot.lane.b32.xlu0 %v823, 127
        %v1034 = vpop.permute.xlu0 %1033
        %1035 = vrot.lane.b32.xlu0 %v824, 127
        %v1036 = vpop.permute.xlu0 %1035
        %1045 = vrot.lane.b32.xlu0 %v817, 119
        %v1046 = vpop.permute.xlu0 %1045
        %1047 = vrot.lane.b32.xlu0 %v818, 119
        %v1048 = vpop.permute.xlu0 %1047
        %1049 = vrot.lane.b32.xlu0 %v819, 119
        %v1050 = vpop.permute.xlu0 %1049
        %1051 = vrot.lane.b32.xlu0 %v820, 119
        %v1052 = vpop.permute.xlu0 %1051
        %1053 = vrot.lane.b32.xlu0 %v821, 119
        %v1054 = vpop.permute.xlu0 %1053
        %1055 = vrot.lane.b32.xlu0 %v822, 119
        %v1056 = vpop.permute.xlu0 %1055
        %1057 = vrot.lane.b32.xlu0 %v823, 119
        %v1058 = vpop.permute.xlu0 %1057
        %1059 = vrot.lane.b32.xlu0 %v824, 119
        %v1060 = vpop.permute.xlu0 %1059
        %1069 = vrot.lane.b32.xlu0 %v817, 111
        %v1070 = vpop.permute.xlu0 %1069
        %1071 = vrot.lane.b32.xlu0 %v818, 111
        %v1072 = vpop.permute.xlu0 %1071
        %1073 = vrot.lane.b32.xlu0 %v819, 111
        %v1074 = vpop.permute.xlu0 %1073
        %1075 = vrot.lane.b32.xlu0 %v820, 111
        %v1076 = vpop.permute.xlu0 %1075
        %1077 = vrot.lane.b32.xlu0 %v821, 111
        %v1078 = vpop.permute.xlu0 %1077
        %1079 = vrot.lane.b32.xlu0 %v822, 111
        %v1080 = vpop.permute.xlu0 %1079
        %1081 = vrot.lane.b32.xlu0 %v823, 111
        %v1082 = vpop.permute.xlu0 %1081
        %1083 = vrot.lane.b32.xlu0 %v824, 111
        %v1084 = vpop.permute.xlu0 %1083
        %v1093 = vld [vmem:[#allocation8] sm:$0xff]
        %v1094 = vld [vmem:[#allocation8 + $0x8] sm:$0xff]
        %v1095 = vld [vmem:[#allocation8 + $0x10] sm:$0xff]
        %v1096 = vld [vmem:[#allocation8 + $0x18] sm:$0xff]
        %v1097 = vld [vmem:[#allocation8 + $0x20] sm:$0xff]
        %v1098 = vld [vmem:[#allocation8 + $0x28] sm:$0xff]
        %v1099 = vld [vmem:[#allocation8 + $0x30] sm:$0xff]
        %v1100 = vld [vmem:[#allocation8 + $0x38] sm:$0xff]
        %v1101 = vld [vmem:[#allocation8 + $0x40] sm:$0xff]
        %v1102 = vld [vmem:[#allocation8 + $0x48] sm:$0xff]
        %v1103 = vld [vmem:[#allocation8 + $0x50] sm:$0xff]
        %v1104 = vld [vmem:[#allocation8 + $0x58] sm:$0xff]
        %v1105 = vld [vmem:[#allocation8 + $0x60] sm:$0xff]
        %v1106 = vld [vmem:[#allocation8 + $0x68] sm:$0xff]
        %v1107 = vld [vmem:[#allocation8 + $0x70] sm:$0xff]
        %v1108 = vld [vmem:[#allocation8 + $0x78] sm:$0xff]
        %v1109 = vld [vmem:[#allocation8 + $0x80] sm:$0xff]
        %v1110 = vld [vmem:[#allocation8 + $0x88] sm:$0xff]
        %v1111 = vld [vmem:[#allocation8 + $0x90] sm:$0xff]
        %v1112 = vld [vmem:[#allocation8 + $0x98] sm:$0xff]
        %v1113 = vld [vmem:[#allocation8 + $0xa0] sm:$0xff]
        %v1114 = vld [vmem:[#allocation8 + $0xa8] sm:$0xff]
        %v1115 = vld [vmem:[#allocation8 + $0xb0] sm:$0xff]
        %v1116 = vld [vmem:[#allocation8 + $0xb8] sm:$0xff]
        %v1117 = vld [vmem:[#allocation8 + $0xc0] sm:$0xff]
        %v1118 = vld [vmem:[#allocation8 + $0xc8] sm:$0xff]
        %v1119 = vld [vmem:[#allocation8 + $0xd0] sm:$0xff]
        %v1120 = vld [vmem:[#allocation8 + $0xd8] sm:$0xff]
        %v1121 = vld [vmem:[#allocation8 + $0xe0] sm:$0xff]
        %v1122 = vld [vmem:[#allocation8 + $0xe8] sm:$0xff]
        %v1123 = vld [vmem:[#allocation8 + $0xf0] sm:$0xff]
        %v1124 = vld [vmem:[#allocation8 + $0xf8] sm:$0xff]
        %v1125 = vld [vmem:[#allocation8 + $0x100] sm:$0xff]
        %v1126 = vld [vmem:[#allocation8 + $0x108] sm:$0xff]
        %v1127 = vld [vmem:[#allocation8 + $0x110] sm:$0xff]
        %v1128 = vld [vmem:[#allocation8 + $0x118] sm:$0xff]
        %v1129 = vld [vmem:[#allocation8 + $0x120] sm:$0xff]
        %v1130 = vld [vmem:[#allocation8 + $0x128] sm:$0xff]
        %v1131 = vld [vmem:[#allocation8 + $0x130] sm:$0xff]
        %v1132 = vld [vmem:[#allocation8 + $0x138] sm:$0xff]
        %v1133 = vld [vmem:[%s7] sm:$0xff]
        %v1134 = vld [vmem:[%s7 + $0x8] sm:$0xff]
        %v1135 = vld [vmem:[%s7 + $0x10] sm:$0xff]
        %v1136 = vld [vmem:[%s7 + $0x18] sm:$0xff]
        %v1137 = vld [vmem:[%s7 + $0x20] sm:$0xff]
        %v1138 = vld [vmem:[%s7 + $0x28] sm:$0xff]
        %v1139 = vld [vmem:[%s7 + $0x30] sm:$0xff]
        %v1140 = vld [vmem:[%s7 + $0x38] sm:$0xff]
        %1142 = vset.pattern.permute.xlu0 0
        %1143 = vperm.xlu0 %1142, %v1133
        %v1144 = vpop.permute.xlu0 %1143
        %1147 = vset.pattern.permute.xlu0 0
        %1148 = vperm.xlu0 %1147, %v1134
        %v1149 = vpop.permute.xlu0 %1148
        %1152 = vset.pattern.permute.xlu0 0
        %1153 = vperm.xlu0 %1152, %v1135
        %v1154 = vpop.permute.xlu0 %1153
        %1157 = vset.pattern.permute.xlu0 0
        %1158 = vperm.xlu0 %1157, %v1136
        %v1159 = vpop.permute.xlu0 %1158
        %1162 = vset.pattern.permute.xlu0 0
        %1163 = vperm.xlu0 %1162, %v1137
        %v1164 = vpop.permute.xlu0 %1163
        %1167 = vset.pattern.permute.xlu0 0
        %1168 = vperm.xlu0 %1167, %v1138
        %v1169 = vpop.permute.xlu0 %1168
        %1172 = vset.pattern.permute.xlu0 0
        %1173 = vperm.xlu0 %1172, %v1139
        %v1174 = vpop.permute.xlu0 %1173
        %1177 = vset.pattern.permute.xlu0 0
        %1178 = vperm.xlu0 %1177, %v1140
        %v1179 = vpop.permute.xlu0 %1178
        %v1182 = vsel %vm390, %v1097, 0
        %v1185 = vsel %vm390, %v1102, 0
        %v1188 = vsel %vm390, %v1107, 0
        %v1191 = vsel %vm390, %v1112, 0
        %v1194 = vsel %vm390, %v1117, 0
        %v1197 = vsel %vm390, %v1122, 0
        %v1200 = vsel %vm390, %v1127, 0
        %v1203 = vsel %vm390, %v1132, 0
        %1205 = vmatprep.subr.mxu0 0.0
        %1206 = vmatpush1.msra.mxu0 %v843
        %1207 = vmatprep.subr.mxu0 0.0
        %1208 = vmatpush1.msra.mxu0 %v844
        %1209 = vmatprep.subr.mxu0 0.0
        %1210 = vmatpush1.msra.mxu0 %v845
        %1211 = vmatprep.subr.mxu0 0.0
        %1212 = vmatpush1.msra.mxu0 %v846
        %1213 = vmatprep.subr.mxu0 0.0
        %1214 = vmatpush1.msra.mxu0 %v847
        %1215 = vmatprep.subr.mxu0 0.0
        %1216 = vmatpush1.msra.mxu0 %v848
        %1217 = vmatprep.subr.mxu0 0.0
        %1218 = vmatpush1.msra.mxu0 %v849
        %1219 = vmatprep.subr.mxu0 0.0
        %1220 = vmatpush1.msra.mxu0 %v850
        %1221 = vmatprep.subr.mxu0 0.0
        %1222 = vmatpush1.msra.mxu0 %v1022
        %1223 = vmatprep.subr.mxu0 0.0
        %1224 = vmatpush1.msra.mxu0 %v1024
        %1225 = vmatprep.subr.mxu0 0.0
        %1226 = vmatpush1.msra.mxu0 %v1026
        %1227 = vmatprep.subr.mxu0 0.0
        %1228 = vmatpush1.msra.mxu0 %v1028
        %1229 = vmatprep.subr.mxu0 0.0
        %1230 = vmatpush1.msra.mxu0 %v1030
        %1231 = vmatprep.subr.mxu0 0.0
        %1232 = vmatpush1.msra.mxu0 %v1032
        %1233 = vmatprep.subr.mxu0 0.0
        %1234 = vmatpush1.msra.mxu0 %v1034
        %1235 = vmatprep.subr.mxu0 0.0
        %1236 = vmatpush1.msra.mxu0 %v1036
        %1237 = vmatprep.subr.mxu0 0.0
        %1238 = vmatpush1.msra.mxu0 %v885
        %1239 = vmatprep.subr.mxu0 0.0
        %1240 = vmatpush1.msra.mxu0 %v886
        %1241 = vmatprep.subr.mxu0 0.0
        %1242 = vmatpush1.msra.mxu0 %v887
        %1243 = vmatprep.subr.mxu0 0.0
        %1244 = vmatpush1.msra.mxu0 %v888
        %1245 = vmatprep.subr.mxu0 0.0
        %1246 = vmatpush1.msra.mxu0 %v889
        %1247 = vmatprep.subr.mxu0 0.0
        %1248 = vmatpush1.msra.mxu0 %v890
        %1249 = vmatprep.subr.mxu0 0.0
        %1250 = vmatpush1.msra.mxu0 %v891
        %1251 = vmatprep.subr.mxu0 0.0
        %1252 = vmatpush1.msra.mxu0 %v892
        %1253 = vmatprep.subr.mxu0 0.0
        %1254 = vmatpush1.msra.mxu0 %v917
        %1255 = vmatprep.subr.mxu0 0.0
        %1256 = vmatpush1.msra.mxu0 %v918
        %1257 = vmatprep.subr.mxu0 0.0
        %1258 = vmatpush1.msra.mxu0 %v919
        %1259 = vmatprep.subr.mxu0 0.0
        %1260 = vmatpush1.msra.mxu0 %v920
        %1261 = vmatprep.subr.mxu0 0.0
        %1262 = vmatpush1.msra.mxu0 %v921
        %1263 = vmatprep.subr.mxu0 0.0
        %1264 = vmatpush1.msra.mxu0 %v922
        %1265 = vmatprep.subr.mxu0 0.0
        %1266 = vmatpush1.msra.mxu0 %v923
        %1267 = vmatprep.subr.mxu0 0.0
        %1268 = vmatpush1.msra.mxu0 %v924
        %1269 = vmatprep.mubr.f32.mxu0 %v1094
        %1270 = vmatmul.mubr.f32.gmra.mrb[0].mxu0 %v1093
        %v1271 = vpop.f32.mrb[0].mxu0
        %v1272 = vadd.f32 %v1144, %v1271
        %v1273 = vpop.f32.mrb[0].mxu0
        %1274 = vmatprep.mubr.f32.mxu0 %v1099
        %1275 = vmatmul.mubr.f32.gmra.mrb[0].mxu0 %v1098
        %v1276 = vpop.f32.mrb[0].mxu0
        %v1277 = vadd.f32 %v1149, %v1276
        %v1278 = vpop.f32.mrb[0].mxu0
        %1279 = vmatprep.mubr.f32.mxu0 %v1104
        %1280 = vmatmul.mubr.f32.gmra.mrb[0].mxu0 %v1103
        %v1281 = vpop.f32.mrb[0].mxu0
        %v1282 = vadd.f32 %v1154, %v1281
        %v1283 = vpop.f32.mrb[0].mxu0
        %1284 = vmatprep.mubr.f32.mxu0 %v1109
        %1285 = vmatmul.mubr.f32.gmra.mrb[0].mxu0 %v1108
        %v1286 = vpop.f32.mrb[0].mxu0
        %v1287 = vadd.f32 %v1159, %v1286
        %v1288 = vpop.f32.mrb[0].mxu0
        %1289 = vmatprep.mubr.f32.mxu0 %v1114
        %1290 = vmatmul.mubr.f32.gmra.mrb[0].mxu0 %v1113
        %v1291 = vpop.f32.mrb[0].mxu0
        %v1292 = vadd.f32 %v1164, %v1291
        %v1293 = vpop.f32.mrb[0].mxu0
        %1294 = vmatprep.mubr.f32.mxu0 %v1119
        %1295 = vmatmul.mubr.f32.gmra.mrb[0].mxu0 %v1118
        %v1296 = vpop.f32.mrb[0].mxu0
        %v1297 = vadd.f32 %v1169, %v1296
        %v1298 = vpop.f32.mrb[0].mxu0
        %1299 = vmatprep.mubr.f32.mxu0 %v1124
        %1300 = vmatmul.mubr.f32.gmra.mrb[0].mxu0 %v1123
        %v1301 = vpop.f32.mrb[0].mxu0
        %v1302 = vadd.f32 %v1174, %v1301
        %v1303 = vpop.f32.mrb[0].mxu0
        %1304 = vmatprep.mubr.f32.mxu0 %v1129
        %1305 = vmatmul.mubr.f32.gmra.mrb[0].mxu0 %v1128
        %v1306 = vpop.f32.mrb[0].mxu0
        %v1307 = vadd.f32 %v1179, %v1306
        %v1308 = vpop.f32.mrb[0].mxu0
        %1309 = vdwg.mxu0
        %1310 = vmatprep.subr.mxu0 0.0
        %1311 = vmatpush1.msra.mxu0 %v1046
        %1312 = vmatprep.subr.mxu0 0.0
        %1313 = vmatpush1.msra.mxu0 %v1048
        %1314 = vmatprep.subr.mxu0 0.0
        %1315 = vmatpush1.msra.mxu0 %v1050
        %1316 = vmatprep.subr.mxu0 0.0
        %1317 = vmatpush1.msra.mxu0 %v1052
        %1318 = vmatprep.subr.mxu0 0.0
        %1319 = vmatpush1.msra.mxu0 %v1054
        %1320 = vmatprep.subr.mxu0 0.0
        %1321 = vmatpush1.msra.mxu0 %v1056
        %1322 = vmatprep.subr.mxu0 0.0
        %1323 = vmatpush1.msra.mxu0 %v1058
        %1324 = vmatprep.subr.mxu0 0.0
        %1325 = vmatpush1.msra.mxu0 %v1060
        %1326 = vmatprep.subr.mxu0 0.0
        %1327 = vmatpush1.msra.mxu0 %v949
        %1328 = vmatprep.subr.mxu0 0.0
        %1329 = vmatpush1.msra.mxu0 %v950
        %1330 = vmatprep.subr.mxu0 0.0
        %1331 = vmatpush1.msra.mxu0 %v951
        %1332 = vmatprep.subr.mxu0 0.0
        %1333 = vmatpush1.msra.mxu0 %v952
        %1334 = vmatprep.subr.mxu0 0.0
        %1335 = vmatpush1.msra.mxu0 %v953
        %1336 = vmatprep.subr.mxu0 0.0
        %1337 = vmatpush1.msra.mxu0 %v954
        %1338 = vmatprep.subr.mxu0 0.0
        %1339 = vmatpush1.msra.mxu0 %v955
        %1340 = vmatprep.subr.mxu0 0.0
        %1341 = vmatpush1.msra.mxu0 %v956
        %1342 = vmatprep.subr.mxu0 0.0
        %1343 = vmatpush1.msra.mxu0 %v981
        %1344 = vmatprep.subr.mxu0 0.0
        %1345 = vmatpush1.msra.mxu0 %v982
        %1346 = vmatprep.subr.mxu0 0.0
        %1347 = vmatpush1.msra.mxu0 %v983
        %1348 = vmatprep.subr.mxu0 0.0
        %1349 = vmatpush1.msra.mxu0 %v984
        %1350 = vmatprep.subr.mxu0 0.0
        %1351 = vmatpush1.msra.mxu0 %v985
        %1352 = vmatprep.subr.mxu0 0.0
        %1353 = vmatpush1.msra.mxu0 %v986
        %1354 = vmatprep.subr.mxu0 0.0
        %1355 = vmatpush1.msra.mxu0 %v987
        %1356 = vmatprep.subr.mxu0 0.0
        %1357 = vmatpush1.msra.mxu0 %v988
        %1358 = vmatprep.subr.mxu0 0.0
        %1359 = vmatpush1.msra.mxu0 %v1070
        %1360 = vmatprep.subr.mxu0 0.0
        %1361 = vmatpush1.msra.mxu0 %v1072
        %1362 = vmatprep.subr.mxu0 0.0
        %1363 = vmatpush1.msra.mxu0 %v1074
        %1364 = vmatprep.subr.mxu0 0.0
        %1365 = vmatpush1.msra.mxu0 %v1076
        %1366 = vmatprep.subr.mxu0 0.0
        %1367 = vmatpush1.msra.mxu0 %v1078
        %1368 = vmatprep.subr.mxu0 0.0
        %1369 = vmatpush1.msra.mxu0 %v1080
        %1370 = vmatprep.subr.mxu0 0.0
        %1371 = vmatpush1.msra.mxu0 %v1082
        %1372 = vmatprep.subr.mxu0 0.0
        %1373 = vmatpush1.msra.mxu0 %v1084
        %1374 = vmatprep.mubr.f32.mxu0 %v1096
        %1375 = vmatmul.mubr.f32.gmra.mrb[0].mxu0 %v1095
        %v1376 = vpop.f32.mrb[0].mxu0
        %v1377 = vadd.f32 %v1272, %v1376
        %v1378 = vpop.f32.mrb[0].mxu0
        %1379 = vmatprep.mubr.f32.mxu0 %v1101
        %1380 = vmatmul.mubr.f32.gmra.mrb[0].mxu0 %v1100
        %v1381 = vpop.f32.mrb[0].mxu0
        %v1382 = vadd.f32 %v1277, %v1381
        %v1383 = vpop.f32.mrb[0].mxu0
        %1384 = vmatprep.mubr.f32.mxu0 %v1106
        %1385 = vmatmul.mubr.f32.gmra.mrb[0].mxu0 %v1105
        %v1386 = vpop.f32.mrb[0].mxu0
        %v1387 = vadd.f32 %v1282, %v1386
        %v1388 = vpop.f32.mrb[0].mxu0
        %1389 = vmatprep.mubr.f32.mxu0 %v1111
        %1390 = vmatmul.mubr.f32.gmra.mrb[0].mxu0 %v1110
        %v1391 = vpop.f32.mrb[0].mxu0
        %v1392 = vadd.f32 %v1287, %v1391
        %v1393 = vpop.f32.mrb[0].mxu0
        %1394 = vmatprep.mubr.f32.mxu0 %v1116
        %1395 = vmatmul.mubr.f32.gmra.mrb[0].mxu0 %v1115
        %v1396 = vpop.f32.mrb[0].mxu0
        %v1397 = vadd.f32 %v1292, %v1396
        %v1398 = vpop.f32.mrb[0].mxu0
        %1399 = vmatprep.mubr.f32.mxu0 %v1121
        %1400 = vmatmul.mubr.f32.gmra.mrb[0].mxu0 %v1120
        %v1401 = vpop.f32.mrb[0].mxu0
        %v1402 = vadd.f32 %v1297, %v1401
        %v1403 = vpop.f32.mrb[0].mxu0
        %1404 = vmatprep.mubr.f32.mxu0 %v1126
        %1405 = vmatmul.mubr.f32.gmra.mrb[0].mxu0 %v1125
        %v1406 = vpop.f32.mrb[0].mxu0
        %v1407 = vadd.f32 %v1302, %v1406
        %v1408 = vpop.f32.mrb[0].mxu0
        %1409 = vmatprep.mubr.f32.mxu0 %v1131
        %1410 = vmatmul.mubr.f32.gmra.mrb[0].mxu0 %v1130
        %v1411 = vpop.f32.mrb[0].mxu0
        %v1412 = vadd.f32 %v1307, %v1411
        %v1413 = vpop.f32.mrb[0].mxu0
        %1414 = vdwg.mxu0
        %1415 = vmatprep.subr.mxu0 0.0
        %1416 = vmatpush1.msra.mxu0 %v1013
        %1417 = vmatprep.subr.mxu0 0.0
        %1418 = vmatpush1.msra.mxu0 %v1014
        %1419 = vmatprep.subr.mxu0 0.0
        %1420 = vmatpush1.msra.mxu0 %v1015
        %1421 = vmatprep.subr.mxu0 0.0
        %1422 = vmatpush1.msra.mxu0 %v1016
        %1423 = vmatprep.subr.mxu0 0.0
        %1424 = vmatpush1.msra.mxu0 %v1017
        %1425 = vmatprep.subr.mxu0 0.0
        %1426 = vmatpush1.msra.mxu0 %v1018
        %1427 = vmatprep.subr.mxu0 0.0
        %1428 = vmatpush1.msra.mxu0 %v1019
        %1429 = vmatprep.subr.mxu0 0.0
        %1430 = vmatpush1.msra.mxu0 %v1020
        %1431 = vmatprep.subr.mxu0 0.0
        %1432 = vmatpush1.msra.mxu0 0.0
        %1433 = vmatprep.subr.mxu0 0.0
        %1434 = vmatpush1.msra.mxu0 0.0
        %1435 = vmatprep.subr.mxu0 0.0
        %1436 = vmatpush1.msra.mxu0 0.0
        %1437 = vmatprep.subr.mxu0 0.0
        %1438 = vmatpush1.msra.mxu0 0.0
        %1439 = vmatprep.subr.mxu0 0.0
        %1440 = vmatpush1.msra.mxu0 0.0
        %1441 = vmatprep.subr.mxu0 0.0
        %1442 = vmatpush1.msra.mxu0 0.0
        %1443 = vmatprep.subr.mxu0 0.0
        %1444 = vmatpush1.msra.mxu0 0.0
        %1445 = vmatprep.subr.mxu0 0.0
        %1446 = vmatpush1.msra.mxu0 0.0
        %1447 = vmatprep.subr.mxu0 0.0
        %1448 = vmatpush1.msra.mxu0 0.0
        %1449 = vmatprep.subr.mxu0 0.0
        %1450 = vmatpush1.msra.mxu0 0.0
        %1451 = vmatprep.subr.mxu0 0.0
        %1452 = vmatpush1.msra.mxu0 0.0
        %1453 = vmatprep.subr.mxu0 0.0
        %1454 = vmatpush1.msra.mxu0 0.0
        %1455 = vmatprep.subr.mxu0 0.0
        %1456 = vmatpush1.msra.mxu0 0.0
        %1457 = vmatprep.subr.mxu0 0.0
        %1458 = vmatpush1.msra.mxu0 0.0
        %1459 = vmatprep.subr.mxu0 0.0
        %1460 = vmatpush1.msra.mxu0 0.0
        %1461 = vmatprep.subr.mxu0 0.0
        %1462 = vmatpush1.msra.mxu0 0.0
        %1463 = vmatprep.subr.mxu0 0.0
        %1464 = vmatpush1.msra.mxu0 0.0
        %1465 = vmatprep.subr.mxu0 0.0
        %1466 = vmatpush1.msra.mxu0 0.0
        %1467 = vmatprep.subr.mxu0 0.0
        %1468 = vmatpush1.msra.mxu0 0.0
        %1469 = vmatprep.subr.mxu0 0.0
        %1470 = vmatpush1.msra.mxu0 0.0
        %1471 = vmatprep.subr.mxu0 0.0
        %1472 = vmatpush1.msra.mxu0 0.0
        %1473 = vmatprep.subr.mxu0 0.0
        %1474 = vmatpush1.msra.mxu0 0.0
        %1475 = vmatprep.subr.mxu0 0.0
        %1476 = vmatpush1.msra.mxu0 0.0
        %1477 = vmatprep.subr.mxu0 0.0
        %1478 = vmatpush1.msra.mxu0 0.0
        %1479 = vmatprep.mubr.f32.mxu0 0.0
        %1480 = vmatmul.mubr.f32.gmra.mrb[0].mxu0 %v1182
        %v1481 = vpop.f32.mrb[0].mxu0
        %v1482 = vadd.f32 %v1377, %v1481
        %v1483 = vpop.f32.mrb[0].mxu0
        %1484 = vmatprep.mubr.f32.mxu0 0.0
        %1485 = vmatmul.mubr.f32.gmra.mrb[0].mxu0 %v1185
        %v1486 = vpop.f32.mrb[0].mxu0
        %v1487 = vadd.f32 %v1382, %v1486
        %v1488 = vpop.f32.mrb[0].mxu0
        %1489 = vmatprep.mubr.f32.mxu0 0.0
        %1490 = vmatmul.mubr.f32.gmra.mrb[0].mxu0 %v1188
        %v1491 = vpop.f32.mrb[0].mxu0
        %v1492 = vadd.f32 %v1387, %v1491
        %v1493 = vpop.f32.mrb[0].mxu0
        %1494 = vmatprep.mubr.f32.mxu0 0.0
        %1495 = vmatmul.mubr.f32.gmra.mrb[0].mxu0 %v1191
        %v1496 = vpop.f32.mrb[0].mxu0
        %v1497 = vadd.f32 %v1392, %v1496
        %v1498 = vpop.f32.mrb[0].mxu0
        %1499 = vmatprep.mubr.f32.mxu0 0.0
        %1500 = vmatmul.mubr.f32.gmra.mrb[0].mxu0 %v1194
        %v1501 = vpop.f32.mrb[0].mxu0
        %v1502 = vadd.f32 %v1397, %v1501
        %v1503 = vpop.f32.mrb[0].mxu0
        %1504 = vmatprep.mubr.f32.mxu0 0.0
        %1505 = vmatmul.mubr.f32.gmra.mrb[0].mxu0 %v1197
        %v1506 = vpop.f32.mrb[0].mxu0
        %v1507 = vadd.f32 %v1402, %v1506
        %v1508 = vpop.f32.mrb[0].mxu0
        %1509 = vmatprep.mubr.f32.mxu0 0.0
        %1510 = vmatmul.mubr.f32.gmra.mrb[0].mxu0 %v1200
        %v1511 = vpop.f32.mrb[0].mxu0
        %v1512 = vadd.f32 %v1407, %v1511
        %v1513 = vpop.f32.mrb[0].mxu0
        %1514 = vmatprep.mubr.f32.mxu0 0.0
        %1515 = vmatmul.mubr.f32.gmra.mrb[0].mxu0 %v1203
        %v1516 = vpop.f32.mrb[0].mxu0
        %v1517 = vadd.f32 %v1412, %v1516
        %v1518 = vpop.f32.mrb[0].mxu0
        %1519 = vdwg.mxu0
        %v1520 = vadd.f32 %v1482, %v381
        %v1521 = vadd.f32 %v1487, %v382
        %v1522 = vadd.f32 %v1492, %v383
        %v1523 = vadd.f32 %v1497, %v384
        %v1524 = vadd.f32 %v1502, %v385
        %v1525 = vadd.f32 %v1507, %v386
        %v1526 = vadd.f32 %v1512, %v387
        %v1527 = vadd.f32 %v1517, %v388
        %1528 = vst.msk [vmem:[%s376] sm:$0xff] %vm390, %v1520
        %1529 = vst.msk [vmem:[%s376 + $0x8] sm:$0xff] %vm390, %v1521
        %1530 = vst.msk [vmem:[%s376 + $0x10] sm:$0xff] %vm390, %v1522
        %1531 = vst.msk [vmem:[%s376 + $0x18] sm:$0xff] %vm390, %v1523
        %1532 = vst.msk [vmem:[%s376 + $0x20] sm:$0xff] %vm390, %v1524
        %1533 = vst.msk [vmem:[%s376 + $0x28] sm:$0xff] %vm390, %v1525
        %1534 = vst.msk [vmem:[%s376 + $0x30] sm:$0xff] %vm390, %v1526
        %1535 = vst.msk [vmem:[%s376 + $0x38] sm:$0xff] %vm390, %v1527
        %s1536 = sand.u32 %s213, 1
        %s1537 = scalar_lea.sflag [#allocation4], %s1536
        %s1538 = sand.u32 %s213, 1
        %s1539 = smul.addr %s1538, 64
        %s1540 = scalar_lea.vmem [#allocation10], %s1539
        // Predicated region
        $region69: #{tpu_custom_call.1} parent=51 // pred_check
          %p1541 = pneg %p223
        $region70: #{tpu_custom_call.1} parent=51 // pred_check_branch
          %1543 = sbr.rel (%p1541) target = $region72
        $region71: #{tpu_custom_call.1} parent=51 // pred_region
          %s1545 = ssub.s32 1024, 1024
          %1546 = vsyncadd %s1537, %s1545
          %s1547 = smul.addr %s27, 8
          %s1548 = smul.addr %s1547, 128
          %s1549 = scalar_lea.hbm %s8, %s1548
          %s1550 = sshll.u32 %s1540, 4
          %s1551 = int_to_ptr.vmem [resolvable:$true] %s1550
          %1556 = dma.vmem_to_hbm [thread:$0]  %s1551, 1024, %s1549, %s1537, 128, 128, 8
        $region72: #{tpu_custom_call.1} parent=51 // pred_fallthru
          _
      $region52: #{tpu_custom_call.1} parent=5 // pred_fallthru
        _
      %p1557 = scmp.le.s32.totalorder 2, %s22
      // Predicated region
      $region73: #{tpu_custom_call.1} parent=5 // pred_check
        %p1558 = pneg %p1557
      $region74: #{tpu_custom_call.1} parent=5 // pred_check_branch
        %1560 = sbr.rel (%p1558) target = $region76
      $region75: #{tpu_custom_call.1} parent=5 // pred_region
        %s1561 = ssub.s32 %s22, 2
        // Predicated region
        $region77: #{tpu_custom_call.1} parent=75 // pred_check
          %p1562 = pneg %p229
        $region78: #{tpu_custom_call.1} parent=75 // pred_check_branch
          %1564 = sbr.rel (%p1562) target = $region80
        $region79: #{tpu_custom_call.1} parent=75 // pred_region
          %s1565 = sand.u32 %s214, 1
          %s1566 = scalar_lea.sflag [#allocation4], %s1565
          %s1567 = sand.u32 %s214, 1
          %s1568 = smul.addr %s1567, 64
          %s1569 = scalar_lea.vmem [#allocation10], %s1568
          %1570 = dma.done %s1566, 1024
        $region80: #{tpu_custom_call.1} parent=75 // pred_fallthru
          _
      $region76: #{tpu_custom_call.1} parent=5 // pred_fallthru
        _
    $region6: #{tpu_custom_call.1} parent=1 // loop_footer
      %s26 = sadd.s32 1, %s22
    $region7: #{tpu_custom_call.1} parent=1 // loop_footer_branch
      %21 = sbr.rel target = $region3
    $region8: #{tpu_custom_call.1} parent=1 // loop_exit
      _
    %1571 = vsyncpa [#allocation3], 1
    %s1572 = scalar_lea.sflag [#allocation3], 1
    %1573 = vsyncpa %s1572, 1
    %1574 = vsyncpa [#allocation6], 1
    %1575 = vsyncpa [#allocation9], 1
    %1576 = vsyncpa [#allocation4], 1
    %s1577 = scalar_lea.sflag [#allocation4], 1
    %1578 = vsyncpa %s1577, 1

</llo_original>
